<compile_context>
chip_gen: v7x
topology: tpu7x:2x2x1
jax: 0.10.0
libtpu: 0.0.40
codegen_flags: <defaults>
</compile_context>

<pallas_src>
import jax
import jax.numpy as jnp
from jax import lax
from jax.experimental import pallas as pl
from jax.experimental.pallas import tpu as pltpu

EPS = 1e-5


# ----------------------------------------------------------------------------- kernel
def _inorm_rows(z):
    # z: (C, S) -- InstanceNorm (affine=False): normalize each channel row over the
    # flattened spatial (lane) axis with the biased, centered variance.
    mean = jnp.mean(z, axis=-1, keepdims=True)
    d = z - mean
    var = jnp.mean(d * d, axis=-1, keepdims=True)
    return d * lax.rsqrt(var + EPS)


def attention_kernel(g_ref, x_ref, wcat_ref, wp_ref, o_ref):
    # g_ref: (1, Fg, S); x_ref / o_ref: (1, Fl, S)  (channels on sublanes, spatial on lanes)
    # wcat_ref: (2*Fint, Fg+Fl) block-diagonal [Wg 0; 0 Wx];  wp_ref: (Fint, 1)
    fint = wp_ref.shape[0]
    g = g_ref[0]                                                # (Fg, S)
    x = x_ref[0]                                                # (Fl, S)

    # Both 1x1x1 convs as ONE MXU matmul (biases dropped: they cancel in the
    # affine=False InstanceNorm mean subtraction).
    gx = jnp.concatenate([g, x], axis=0)                        # (Fg+Fl, S)
    y = jnp.dot(wcat_ref[...], gx,
                preferred_element_type=jnp.float32,
                precision=lax.Precision.HIGHEST)                # (2*Fint, S)

    # InstanceNorm all 2*Fint rows in one pass, then split into g1 / x1.
    yn = _inorm_rows(y)
    p = jnp.maximum(yn[:fint] + yn[fint:], 0.0)                 # ReLU(g1n + x1n), (Fint, S)

    # psi conv has ONE output channel: VPU multiply + sublane reduction
    # (cheaper than an M=1 MXU matmul), then InstanceNorm + sigmoid (EUP exp).
    s = jnp.sum(p * wp_ref[...], axis=0, keepdims=True)         # (1, S)
    psi = jax.nn.sigmoid(_inorm_rows(s))                        # (1, S)

    o_ref[0] = (x * psi).astype(o_ref.dtype)


# ----------------------------------------------------------------------------- wrapper
def attention_block(g, x, params):
    # g: (N, F_g, D, H, W), x: (N, F_l, D, H, W)  (PyTorch-native NCDHW) -> (N, F_l, D, H, W)
    n, fg, d, h, w = g.shape
    fl = x.shape[1]
    fint = params["wg"].shape[0]
    s = d * h * w

    g3 = g.reshape(n, fg, s)
    x3 = x.reshape(n, fl, s)

    # Block-diagonal fused conv weight [Wg 0; 0 Wx] and the psi weight as a column.
    w_cat = jnp.zeros((2 * fint, fg + fl), jnp.float32)
    w_cat = w_cat.at[:fint, :fg].set(params["wg"].astype(jnp.float32))
    w_cat = w_cat.at[fint:, fg:].set(params["wx"].astype(jnp.float32))
    wp_col = params["wp"].reshape(fint, 1).astype(jnp.float32)

    # Explicit VMEM budget: double-buffered g/x/out blocks + intermediates + headroom.
    itemsize = jnp.dtype(x.dtype).itemsize
    block_bytes = (fg + 2 * fl) * s * itemsize
    interm_bytes = (4 * fint + fg + fl + 2) * s * 4
    vmem_limit = int(min(2 * block_bytes + 2 * interm_bytes + (8 << 20), 100 << 20))

    out = pl.pallas_call(
        attention_kernel,
        out_shape=jax.ShapeDtypeStruct((n, fl, s), x.dtype),
        grid_spec=pltpu.PrefetchScalarGridSpec(
            num_scalar_prefetch=0,
            grid=(n,),
            in_specs=[
                pl.BlockSpec((1, fg, s), lambda i: (i, 0, 0)),        # g (one instance)
                pl.BlockSpec((1, fl, s), lambda i: (i, 0, 0)),        # x (one instance)
                pl.BlockSpec((2 * fint, fg + fl), lambda i: (0, 0)),  # fused conv weight
                pl.BlockSpec((fint, 1), lambda i: (0, 0)),            # psi weight (column)
            ],
            out_specs=pl.BlockSpec((1, fl, s), lambda i: (i, 0, 0)),
        ),
        compiler_params=pltpu.CompilerParams(
            dimension_semantics=("parallel",),
            vmem_limit_bytes=vmem_limit),
    )(g3, x3, w_cat, wp_col)
    return out.reshape(n, fl, d, h, w)


# ----------------------------------------------------------------------------- pure-JAX reference
def _instance_norm_ref(z):
    mean = jnp.mean(z, axis=(2, 3, 4), keepdims=True)
    var = jnp.mean((z - mean) ** 2, axis=(2, 3, 4), keepdims=True)
    return (z - mean) / jnp.sqrt(var + EPS)


def attention_ref(g, x, params):
    # Full PyTorch semantics INCLUDING the conv biases (they cancel in the norm).
    g1 = jnp.einsum("ncdhw,kc->nkdhw", g, params["wg"], precision="highest")
    g1 = g1 + params["bg"][None, :, None, None, None]
    x1 = jnp.einsum("ncdhw,kc->nkdhw", x, params["wx"], precision="highest")
    x1 = x1 + params["bx"][None, :, None, None, None]
    p = jnp.maximum(_instance_norm_ref(g1) + _instance_norm_ref(x1), 0.0)
    s = jnp.einsum("ncdhw,kc->nkdhw", p, params["wp"], precision="highest")
    s = s + params["bp"][None, :, None, None, None]
    psi = jax.nn.sigmoid(_instance_norm_ref(s))
    return x * psi


# ----------------------------------------------------------------------------- main
if __name__ == "__main__":
    N, F_G, F_L, F_INT, D, H, W = 2, 16, 32, 16, 8, 8, 8

    key = jax.random.PRNGKey(0)
    ks = jax.random.split(key, 8)
    g = jax.random.normal(ks[0], (N, F_G, D, H, W), jnp.float32)
    x = jax.random.normal(ks[1], (N, F_L, D, H, W), jnp.float32)
    params = {
        # PyTorch Conv3d(k=1) weight layout: (out_ch, in_ch).
        "wg": jax.random.normal(ks[2], (F_INT, F_G), jnp.float32) * 0.2,
        "bg": jax.random.normal(ks[3], (F_INT,), jnp.float32) * 0.1,
        "wx": jax.random.normal(ks[4], (F_INT, F_L), jnp.float32) * 0.2,
        "bx": jax.random.normal(ks[5], (F_INT,), jnp.float32) * 0.1,
        "wp": jax.random.normal(ks[6], (1, F_INT), jnp.float32) * 0.2,
        "bp": jax.random.normal(ks[7], (1,), jnp.float32) * 0.1,
    }

    out = jax.block_until_ready(jax.jit(attention_block)(g, x, params))
    ref = attention_ref(g, x, params)

    max_err = float(jnp.max(jnp.abs(out - ref)))
    assert out.shape == (N, F_L, D, H, W), out.shape
    assert max_err < 2e-3, f"mismatch vs reference: {max_err}"
    print("KERNEL_OK")
</pallas_src>

<mosaic_0001>
module attributes {stable_mosaic.version = 11 : i64} {
  func.func @attention_kernel(%arg0: i32, %arg1: memref<1x16x512xf32, #tpu.memory_space<vmem>>, %arg2: memref<1x32x512xf32, #tpu.memory_space<vmem>>, %arg3: memref<32x48xf32, #tpu.memory_space<vmem>>, %arg4: memref<16x1xf32, #tpu.memory_space<vmem>>, %arg5: memref<1x32x512xf32, #tpu.memory_space<vmem>>) attributes {dimension_semantics = [#tpu.dimension_semantics<parallel>], iteration_bounds = array<i64: 2>, scalar_prefetch = 0 : i64, scratch_operands = 0 : i64, tpu.core_type = #tpu.core_type<tc>, window_params = [{transform_indices = @transform_0, window_bounds = array<i64: 1, 16, 512>}, {transform_indices = @transform_1, window_bounds = array<i64: 1, 32, 512>}, {pipeline_mode = #tpu.pipeline_mode<synchronous>, transform_indices = @transform_2, window_bounds = array<i64: 32, 48>}, {pipeline_mode = #tpu.pipeline_mode<synchronous>, transform_indices = @transform_3, window_bounds = array<i64: 16, 1>}, {transform_indices = @transform_4, window_bounds = array<i64: 1, 32, 512>}]} {
    %c0 = arith.constant 0 : index
    %c0_0 = arith.constant 0 : index
    %c0_1 = arith.constant 0 : index
    %0 = vector.load %arg1[%c0, %c0_0, %c0_1] : memref<1x16x512xf32, #tpu.memory_space<vmem>>, vector<1x16x512xf32>
    %1 = vector.shape_cast %0 : vector<1x16x512xf32> to vector<16x512xf32>
    %c0_2 = arith.constant 0 : index
    %c0_3 = arith.constant 0 : index
    %c0_4 = arith.constant 0 : index
    %2 = vector.load %arg2[%c0_2, %c0_3, %c0_4] : memref<1x32x512xf32, #tpu.memory_space<vmem>>, vector<1x32x512xf32>
    %3 = vector.shape_cast %2 : vector<1x32x512xf32> to vector<32x512xf32>
    %4 = tpu.concatenate %1, %3 in 0 : vector<16x512xf32>, vector<32x512xf32> -> vector<48x512xf32>
    %c0_5 = arith.constant 0 : index
    %c0_6 = arith.constant 0 : index
    %5 = vector.load %arg3[%c0_5, %c0_6] : memref<32x48xf32, #tpu.memory_space<vmem>>, vector<32x48xf32>
    %cst = arith.constant dense<0.000000e+00> : vector<32x512xf32>
    %6 = tpu.matmul %5, %4, %cst {dimension_numbers = #tpu.dot_dimension_numbers<[1], [0], [0], [1], [0, 0, 1, 1], [], []>, precision = #tpu.contract_precision<fp32>} : vector<32x48xf32>, vector<48x512xf32>, vector<32x512xf32> -> vector<32x512xf32>
    %cst_7 = arith.constant dense<0.000000e+00> : vector<32xf32>
    %7 = vector.multi_reduction <add>, %6, %cst_7 [1] : vector<32x512xf32> to vector<32xf32>
    %8 = vector.shape_cast %7 : vector<32xf32> to vector<32x1xf32>
    %cst_8 = arith.constant 5.120000e+02 : f32
    %9 = vector.broadcast %cst_8 : f32 to vector<32x1xf32>
    %10 = arith.divf %8, %9 : vector<32x1xf32>
    %11 = vector.broadcast %10 : vector<32x1xf32> to vector<32x512xf32>
    %12 = arith.subf %6, %11 : vector<32x512xf32>
    %13 = arith.mulf %12, %12 : vector<32x512xf32>
    %cst_9 = arith.constant dense<0.000000e+00> : vector<32xf32>
    %14 = vector.multi_reduction <add>, %13, %cst_9 [1] : vector<32x512xf32> to vector<32xf32>
    %15 = vector.shape_cast %14 : vector<32xf32> to vector<32x1xf32>
    %cst_10 = arith.constant 5.120000e+02 : f32
    %16 = vector.broadcast %cst_10 : f32 to vector<32x1xf32>
    %17 = arith.divf %15, %16 : vector<32x1xf32>
    %cst_11 = arith.constant 9.99999974E-6 : f32
    %18 = vector.broadcast %cst_11 : f32 to vector<32x1xf32>
    %19 = arith.addf %17, %18 : vector<32x1xf32>
    %20 = math.rsqrt %19 : vector<32x1xf32>
    %21 = vector.broadcast %20 : vector<32x1xf32> to vector<32x512xf32>
    %22 = arith.mulf %12, %21 : vector<32x512xf32>
    %23 = vector.extract_strided_slice %22 {offsets = [0, 0], sizes = [16, 512], strides = [1, 1]} : vector<32x512xf32> to vector<16x512xf32>
    %24 = vector.extract_strided_slice %22 {offsets = [16, 0], sizes = [16, 512], strides = [1, 1]} : vector<32x512xf32> to vector<16x512xf32>
    %25 = arith.addf %23, %24 : vector<16x512xf32>
    %cst_12 = arith.constant 0.000000e+00 : f32
    %26 = vector.broadcast %cst_12 : f32 to vector<16x512xf32>
    %27 = arith.maximumf %25, %26 : vector<16x512xf32>
    %c0_13 = arith.constant 0 : index
    %c0_14 = arith.constant 0 : index
    %28 = vector.load %arg4[%c0_13, %c0_14] : memref<16x1xf32, #tpu.memory_space<vmem>>, vector<16x1xf32>
    %29 = vector.broadcast %28 : vector<16x1xf32> to vector<16x512xf32>
    %30 = arith.mulf %27, %29 : vector<16x512xf32>
    %cst_15 = arith.constant dense<0.000000e+00> : vector<512xf32>
    %31 = vector.multi_reduction <add>, %30, %cst_15 [0] : vector<16x512xf32> to vector<512xf32>
    %32 = vector.shape_cast %31 : vector<512xf32> to vector<1x512xf32>
    %cst_16 = arith.constant dense<0.000000e+00> : vector<1xf32>
    %33 = vector.multi_reduction <add>, %32, %cst_16 [1] : vector<1x512xf32> to vector<1xf32>
    %34 = vector.shape_cast %33 : vector<1xf32> to vector<1x1xf32>
    %cst_17 = arith.constant 5.120000e+02 : f32
    %35 = vector.broadcast %cst_17 : f32 to vector<1x1xf32>
    %36 = arith.divf %34, %35 : vector<1x1xf32>
    %37 = vector.broadcast %36 : vector<1x1xf32> to vector<1x512xf32>
    %38 = arith.subf %32, %37 : vector<1x512xf32>
    %39 = arith.mulf %38, %38 : vector<1x512xf32>
    %cst_18 = arith.constant dense<0.000000e+00> : vector<1xf32>
    %40 = vector.multi_reduction <add>, %39, %cst_18 [1] : vector<1x512xf32> to vector<1xf32>
    %41 = vector.shape_cast %40 : vector<1xf32> to vector<1x1xf32>
    %cst_19 = arith.constant 5.120000e+02 : f32
    %42 = vector.broadcast %cst_19 : f32 to vector<1x1xf32>
    %43 = arith.divf %41, %42 : vector<1x1xf32>
    %cst_20 = arith.constant 9.99999974E-6 : f32
    %44 = vector.broadcast %cst_20 : f32 to vector<1x1xf32>
    %45 = arith.addf %43, %44 : vector<1x1xf32>
    %46 = math.rsqrt %45 : vector<1x1xf32>
    %47 = vector.broadcast %46 : vector<1x1xf32> to vector<1x512xf32>
    %48 = arith.mulf %38, %47 : vector<1x512xf32>
    %49 = arith.negf %48 : vector<1x512xf32>
    %50 = math.exp %49 : vector<1x512xf32>
    %cst_21 = arith.constant 1.000000e+00 : f32
    %51 = vector.broadcast %cst_21 : f32 to vector<1x512xf32>
    %52 = arith.addf %51, %50 : vector<1x512xf32>
    %53 = arith.divf %51, %52 : vector<1x512xf32>
    %54 = vector.broadcast %53 : vector<1x512xf32> to vector<32x512xf32>
    %55 = arith.mulf %3, %54 : vector<32x512xf32>
    %c0_22 = arith.constant 0 : index
    %c0_23 = arith.constant 0 : index
    %c0_24 = arith.constant 0 : index
    %56 = vector.load %arg5[%c0_22, %c0_23, %c0_24] : memref<1x32x512xf32, #tpu.memory_space<vmem>>, vector<1x32x512xf32>
    %57 = vector.shape_cast %56 : vector<1x32x512xf32> to vector<32x512xf32>
    %58 = vector.shape_cast %55 : vector<32x512xf32> to vector<1x32x512xf32>
    tpu.vector_store %arg5[%c0_22, %c0_23, %c0_24], %58 {strides = array<i32>} : memref<1x32x512xf32, #tpu.memory_space<vmem>>, vector<1x32x512xf32>,
    return
  }
  func.func @transform_0(%arg0: i32) -> (i32, i32, i32) {
    %c0_i32 = arith.constant 0 : i32
    %c0_i32_0 = arith.constant 0 : i32
    %c0_i32_1 = arith.constant 0 : i32
    return %arg0, %c0_i32, %c0_i32_0 : i32, i32, i32
  }
  func.func @transform_1(%arg0: i32) -> (i32, i32, i32) {
    %c0_i32 = arith.constant 0 : i32
    %c0_i32_0 = arith.constant 0 : i32
    %c0_i32_1 = arith.constant 0 : i32
    return %arg0, %c0_i32, %c0_i32_0 : i32, i32, i32
  }
  func.func @transform_2(%arg0: i32) -> (i32, i32) {
    %c0_i32 = arith.constant 0 : i32
    %c0_i32_0 = arith.constant 0 : i32
    %c0_i32_1 = arith.constant 0 : i32
    return %c0_i32, %c0_i32_0 : i32, i32
  }
  func.func @transform_3(%arg0: i32) -> (i32, i32) {
    %c0_i32 = arith.constant 0 : i32
    %c0_i32_0 = arith.constant 0 : i32
    %c0_i32_1 = arith.constant 0 : i32
    return %c0_i32, %c0_i32_0 : i32, i32
  }
  func.func @transform_4(%arg0: i32) -> (i32, i32, i32) {
    %c0_i32 = arith.constant 0 : i32
    %c0_i32_0 = arith.constant 0 : i32
    %c0_i32_1 = arith.constant 0 : i32
    return %arg0, %c0_i32, %c0_i32_0 : i32, i32, i32
  }
}

</mosaic_0001>

<llo_original>
// kernel: attention_block.1
$region0: #{attention_block.1}
  #allocation0 [shape = 'u32[]', space=smem, size = 0x4, offset = 0x4, fixed_abs, tag = 'smem constant byte address 0x4 - core index']
  #allocation1 [shape = 'u32[144,128]{1,0:T(1,128)}', space=vmem, size = 0x12000, scoped, tag = 'internal scratch']
  %s0 = inlined_call_operand.vmem [shape: f32[2,16,512], index: 0, kind: input, shape index: {}]
  %s1 = inlined_call_operand.vmem [shape: f32[2,32,512], index: 1, kind: input, shape index: {}]
  %s2 = inlined_call_operand.vmem [shape: f32[32,48], index: 2, kind: input, shape index: {}]
  %s3 = inlined_call_operand.vmem [shape: f32[16,1], index: 3, kind: input, shape index: {}]
  %s4 = inlined_call_operand.vmem [shape: f32[2,32,512], index: 4, kind: output, shape index: {}]
  %s5 = sld [smem:[#allocation0]]
  $region49: #{attention_block.1} parent=0
    _
  %s7 = ssub.s32 1, %s5
  %s8 = scalar_select 0, %s7, %s5
  loop: start=0, step=1, limit=4
  $region2: #{attention_block.1} parent=0 // loop_pre_header
    _
  $region3: #{attention_block.1} parent=0 // loop_header
    %s10 = sphi 0, %s14
    %p11 = scmp.ge.s32.totalorder %s10, 4
    %s20 = sphi 0, %s22
    %s23 = sphi 0, %s20
    %s24 = sphi 0, %s23
    %s40 = sphi 0, %s24
    %s46 = sphi 0, %s48
    %s49 = sphi 0, %s46
    %s50 = sphi 0, %s49
    %s66 = sphi 0, %s50
    %s70 = sphi 0, %s70
    %s72 = sphi 0, %s70
    %s73 = sphi 0, %s72
    %s87 = sphi 0, %s73
    %s91 = sphi 0, %s91
    %s93 = sphi 0, %s91
    %s94 = sphi 0, %s93
    %s108 = sphi 0, %s94
    %s114 = sphi 0, %s116
    %s117 = sphi 0, %s114
    %s118 = sphi 0, %s117
    %s134 = sphi 0, %s118
  $region4: #{attention_block.1} parent=0 // loop_header_branch
    %13 = sbr.rel (%p11) target = $region8
  $region5: #{attention_block.1} parent=0 // loop_body
    %s15 = ssub.s32 %s10, 1
    %s16 = ssub.s32 %s10, 2
    %s17 = sadd.s32 %s10, 1
    %s18 = ssub.s32 %s10, %s17
    %p19 = scmp.eq.s32.totalorder %s18, 0
    %s21 = sadd.s32 %s20, 1
    %s22 = scalar_select %p19, %s20, %s21
    %p25 = pneg %p19
    %p26 = scmp.eq.s32.totalorder %s10, 1
    %p27 = por %p25, %p26
    %p28 = scmp.ne.s32.totalorder %s20, %s23
    %p29 = scmp.eq.s32.totalorder %s10, 0
    %p30 = por %p28, %p29
    %p31 = scmp.ne.s32.totalorder %s20, %s23
    %p32 = scmp.eq.s32.totalorder %s15, 1
    %p33 = por %p31, %p32
    %p34 = scmp.ne.s32.totalorder %s23, %s24
    %p35 = scmp.eq.s32.totalorder %s15, 0
    %p36 = por %p34, %p35
    %p37 = scmp.ne.s32.totalorder %s23, %s24
    %p38 = scmp.eq.s32.totalorder %s16, 1
    %p39 = por %p37, %p38
    %p41 = scmp.ne.s32.totalorder %s24, %s40
    %p42 = scmp.eq.s32.totalorder %s16, 0
    %p43 = por %p41, %p42
    %s44 = ssub.s32 %s10, %s17
    %p45 = scmp.eq.s32.totalorder %s44, 0
    %s47 = sadd.s32 %s46, 1
    %s48 = scalar_select %p45, %s46, %s47
    %p51 = pneg %p45
    %p52 = scmp.eq.s32.totalorder %s10, 1
    %p53 = por %p51, %p52
    %p54 = scmp.ne.s32.totalorder %s46, %s49
    %p55 = scmp.eq.s32.totalorder %s10, 0
    %p56 = por %p54, %p55
    %p57 = scmp.ne.s32.totalorder %s46, %s49
    %p58 = scmp.eq.s32.totalorder %s15, 1
    %p59 = por %p57, %p58
    %p60 = scmp.ne.s32.totalorder %s49, %s50
    %p61 = scmp.eq.s32.totalorder %s15, 0
    %p62 = por %p60, %p61
    %p63 = scmp.ne.s32.totalorder %s49, %s50
    %p64 = scmp.eq.s32.totalorder %s16, 1
    %p65 = por %p63, %p64
    %p67 = scmp.ne.s32.totalorder %s50, %s66
    %p68 = scmp.eq.s32.totalorder %s16, 0
    %p69 = por %p67, %p68
    %s71 = sadd.s32 %s70, 1
    %p74 = scmp.eq.s32.totalorder %s10, 1
    %p75 = scmp.ne.s32.totalorder %s70, %s72
    %p76 = scmp.eq.s32.totalorder %s10, 0
    %p77 = por %p75, %p76
    %p78 = scmp.ne.s32.totalorder %s70, %s72
    %p79 = scmp.eq.s32.totalorder %s15, 1
    %p80 = por %p78, %p79
    %p81 = scmp.ne.s32.totalorder %s72, %s73
    %p82 = scmp.eq.s32.totalorder %s15, 0
    %p83 = por %p81, %p82
    %p84 = scmp.ne.s32.totalorder %s72, %s73
    %p85 = scmp.eq.s32.totalorder %s16, 1
    %p86 = por %p84, %p85
    %p88 = scmp.ne.s32.totalorder %s73, %s87
    %p89 = scmp.eq.s32.totalorder %s16, 0
    %p90 = por %p88, %p89
    %s92 = sadd.s32 %s91, 1
    %p95 = scmp.eq.s32.totalorder %s10, 1
    %p96 = scmp.ne.s32.totalorder %s91, %s93
    %p97 = scmp.eq.s32.totalorder %s10, 0
    %p98 = por %p96, %p97
    %p99 = scmp.ne.s32.totalorder %s91, %s93
    %p100 = scmp.eq.s32.totalorder %s15, 1
    %p101 = por %p99, %p100
    %p102 = scmp.ne.s32.totalorder %s93, %s94
    %p103 = scmp.eq.s32.totalorder %s15, 0
    %p104 = por %p102, %p103
    %p105 = scmp.ne.s32.totalorder %s93, %s94
    %p106 = scmp.eq.s32.totalorder %s16, 1
    %p107 = por %p105, %p106
    %p109 = scmp.ne.s32.totalorder %s94, %s108
    %p110 = scmp.eq.s32.totalorder %s16, 0
    %p111 = por %p109, %p110
    %s112 = ssub.s32 %s10, %s17
    %p113 = scmp.eq.s32.totalorder %s112, 0
    %s115 = sadd.s32 %s114, 1
    %s116 = scalar_select %p113, %s114, %s115
    %p119 = pneg %p113
    %p120 = scmp.eq.s32.totalorder %s10, 1
    %p121 = por %p119, %p120
    %p122 = scmp.ne.s32.totalorder %s114, %s117
    %p123 = scmp.eq.s32.totalorder %s10, 0
    %p124 = por %p122, %p123
    %p125 = scmp.ne.s32.totalorder %s114, %s117
    %p126 = scmp.eq.s32.totalorder %s15, 1
    %p127 = por %p125, %p126
    %p128 = scmp.ne.s32.totalorder %s117, %s118
    %p129 = scmp.eq.s32.totalorder %s15, 0
    %p130 = por %p128, %p129
    %p131 = scmp.ne.s32.totalorder %s117, %s118
    %p132 = scmp.eq.s32.totalorder %s16, 1
    %p133 = por %p131, %p132
    %p135 = scmp.ne.s32.totalorder %s118, %s134
    %p136 = scmp.eq.s32.totalorder %s16, 0
    %p137 = por %p135, %p136
    %p138 = scmp.le.s32.totalorder 1, %s10
    %p139 = scmp.lt.s32.totalorder %s10, 3
    %p140 = pnand %p138, %p139
    %p141 = pneg %p140
    // Predicated region
    $region9: #{attention_block.1} parent=5 // pred_check
      _
    $region10: #{attention_block.1} parent=5 // pred_check_branch
      %143 = sbr.rel (%p140) target = $region12
    $region11: #{attention_block.1} parent=5 // pred_region
      %s144 = ssub.s32 %s10, 1
      // Predicated region
      $region13: #{attention_block.1} parent=11 // pred_check
        %p145 = pneg %p83
      $region14: #{attention_block.1} parent=11 // pred_check_branch
        %147 = sbr.rel (%p145) target = $region16
      $region15: #{attention_block.1} parent=11 // pred_region
        _
      $region16: #{attention_block.1} parent=11 // pred_fallthru
        _
      // Predicated region
      $region17: #{attention_block.1} parent=11 // pred_check
        %p148 = pneg %p104
      $region18: #{attention_block.1} parent=11 // pred_check_branch
        %150 = sbr.rel (%p148) target = $region20
      $region19: #{attention_block.1} parent=11 // pred_region
        _
      $region20: #{attention_block.1} parent=11 // pred_fallthru
        _
    $region12: #{attention_block.1} parent=5 // pred_fallthru
      _
    %p151 = scmp.lt.s32.totalorder %s10, 2
    // Predicated region
    $region21: #{attention_block.1} parent=5 // pred_check
      %p152 = pneg %p151
    $region22: #{attention_block.1} parent=5 // pred_check_branch
      %154 = sbr.rel (%p152) target = $region24
    $region23: #{attention_block.1} parent=5 // pred_region
      // Predicated region
      $region25: #{attention_block.1} parent=23 // pred_check
        %p155 = pneg %p30
      $region26: #{attention_block.1} parent=23 // pred_check_branch
        %157 = sbr.rel (%p155) target = $region28
      $region27: #{attention_block.1} parent=23 // pred_region
        %p158 = scmp.lt.s32.totalorder %s10, 1
        %s159 = scalar_select %p158, %s10, 1
        %s160 = smul.addr %s159, 8
        %s161 = smul.addr %s160, 8
        %s162 = scalar_lea.vmem %s0, %s161
      $region28: #{attention_block.1} parent=23 // pred_fallthru
        _
      // Predicated region
      $region29: #{attention_block.1} parent=23 // pred_check
        %p163 = pneg %p56
      $region30: #{attention_block.1} parent=23 // pred_check_branch
        %165 = sbr.rel (%p163) target = $region32
      $region31: #{attention_block.1} parent=23 // pred_region
        %p166 = scmp.lt.s32.totalorder %s10, 1
        %s167 = scalar_select %p166, %s10, 1
        %s168 = smul.addr %s167, 16
        %s169 = smul.addr %s168, 8
        %s170 = scalar_lea.vmem %s1, %s169
      $region32: #{attention_block.1} parent=23 // pred_fallthru
        _
    $region24: #{attention_block.1} parent=5 // pred_fallthru
      _
    %p171 = scmp.le.s32.totalorder 1, %s10
    %p172 = scmp.lt.s32.totalorder %s10, 3
    %p173 = pnand %p171, %p172
    %p174 = pneg %p173
    // Predicated region
    $region33: #{attention_block.1} parent=5 // pred_check
      _
    $region34: #{attention_block.1} parent=5 // pred_check_branch
      %176 = sbr.rel (%p173) target = $region36
    $region35: #{attention_block.1} parent=5 // pred_region
      %s177 = ssub.s32 %s10, 1
      %p178 = scmp.lt.s32.totalorder %s15, 1
      %s179 = scalar_select %p178, %s15, 1
      %s180 = smul.addr %s179, 8
      %s181 = smul.addr %s180, 8
      %s182 = scalar_lea.vmem %s0, %s181
      %p183 = pneg %p36
      %p184 = pneg %p33
      %p185 = scmp.lt.s32.totalorder %s15, 1
      %s186 = scalar_select %p185, %s15, 1
      %s187 = smul.addr %s186, 16
      %s188 = smul.addr %s187, 8
      %s189 = scalar_lea.vmem %s1, %s188
      %p190 = pneg %p62
      %p191 = pneg %p59
      %p192 = pneg %p83
      %p193 = pneg %p80
      %p194 = pneg %p104
      %p195 = pneg %p101
      %p196 = pneg %p130
      %p197 = pneg %p127
      %p198 = scmp.lt.s32.totalorder %s15, 1
      %s199 = scalar_select %p198, %s15, 1
      %s200 = smul.addr %s199, 16
      %s201 = smul.addr %s200, 8
      %s202 = scalar_lea.vmem %s4, %s201
      %p203 = scmp.lt.s32.totalorder %s15, 1
      %s204 = scalar_select %p203, %s15, 1
      %s205 = smul.addr %s204, 8
      %s206 = smul.addr %s205, 8
      %s207 = scalar_lea.vmem %s0, %s206
      %p208 = scmp.lt.s32.totalorder %s15, 1
      %s209 = scalar_select %p208, %s15, 1
      %s210 = smul.addr %s209, 16
      %s211 = smul.addr %s210, 8
      %s212 = scalar_lea.vmem %s1, %s211
      %p213 = scmp.lt.s32.totalorder %s15, 1
      %s214 = scalar_select %p213, %s15, 1
      %s215 = smul.addr %s214, 16
      %s216 = smul.addr %s215, 8
      %s217 = scalar_lea.vmem %s4, %s216
      %v218 = vld [vmem:[%s207] sm:$0xff]
      %v219 = vld [vmem:[%s207 + $0x8] sm:$0xff]
      %v220 = vld [vmem:[%s207 + $0x10] sm:$0xff]
      %v221 = vld [vmem:[%s207 + $0x18] sm:$0xff]
      %v222 = vld [vmem:[%s207 + $0x20] sm:$0xff]
      %v223 = vld [vmem:[%s207 + $0x28] sm:$0xff]
      %v224 = vld [vmem:[%s207 + $0x30] sm:$0xff]
      %v225 = vld [vmem:[%s207 + $0x38] sm:$0xff]
      %v226 = vld [vmem:[%s212] sm:$0xff]
      %v227 = vld [vmem:[%s212 + $0x8] sm:$0xff]
      %v228 = vld [vmem:[%s212 + $0x10] sm:$0xff]
      %v229 = vld [vmem:[%s212 + $0x18] sm:$0xff]
      %v230 = vld [vmem:[%s212 + $0x20] sm:$0xff]
      %v231 = vld [vmem:[%s212 + $0x28] sm:$0xff]
      %v232 = vld [vmem:[%s212 + $0x30] sm:$0xff]
      %v233 = vld [vmem:[%s212 + $0x38] sm:$0xff]
      %v234 = vld [vmem:[%s212 + $0x40] sm:$0xff]
      %v235 = vld [vmem:[%s212 + $0x48] sm:$0xff]
      %v236 = vld [vmem:[%s212 + $0x50] sm:$0xff]
      %v237 = vld [vmem:[%s212 + $0x58] sm:$0xff]
      %v238 = vld [vmem:[%s212 + $0x60] sm:$0xff]
      %v239 = vld [vmem:[%s212 + $0x68] sm:$0xff]
      %v240 = vld [vmem:[%s212 + $0x70] sm:$0xff]
      %v241 = vld [vmem:[%s212 + $0x78] sm:$0xff]
      %v242 = vld [vmem:[%s2] sm:$0xff]
      %v243 = vld [vmem:[%s2 + $0x8] sm:$0xff]
      %v244 = vld [vmem:[%s2 + $0x10] sm:$0xff]
      %v245 = vld [vmem:[%s2 + $0x18] sm:$0xff]
      %vm246 = vcmask 392192
      %v248 = vsel %vm246, %v242, 0
      %v251 = vsel %vm246, %v243, 0
      %v254 = vsel %vm246, %v244, 0
      %v257 = vsel %vm246, %v245, 0
      %v259 = vand.u32 %v219, 4294901760
      %260 = vmatprep.subr.mxu0 %v259
      %v261 = vand.u32 %v218, 4294901760
      %262 = vmatpush1.msra.mxu0 %v261
      %v263 = vand.u32 %v223, 4294901760
      %264 = vmatprep.subr.mxu0 %v263
      %v265 = vand.u32 %v222, 4294901760
      %266 = vmatpush1.msra.mxu0 %v265
      %v267 = vand.u32 %v227, 4294901760
      %268 = vmatprep.subr.mxu0 %v267
      %v269 = vand.u32 %v226, 4294901760
      %270 = vmatpush1.msra.mxu0 %v269
      %v271 = vand.u32 %v231, 4294901760
      %272 = vmatprep.subr.mxu0 %v271
      %v273 = vand.u32 %v230, 4294901760
      %274 = vmatpush1.msra.mxu0 %v273
      %v275 = vand.u32 %v235, 4294901760
      %276 = vmatprep.subr.mxu0 %v275
      %v277 = vand.u32 %v234, 4294901760
      %278 = vmatpush1.msra.mxu0 %v277
      %v279 = vand.u32 %v239, 4294901760
      %280 = vmatprep.subr.mxu0 %v279
      %v281 = vand.u32 %v238, 4294901760
      %282 = vmatpush1.msra.mxu0 %v281
      %283 = vmatprep.subr.mxu0 0.0
      %284 = vmatpush1.msra.mxu0 0.0
      %285 = vmatprep.subr.mxu0 0.0
      %286 = vmatpush1.msra.mxu0 0.0
      %287 = vmatprep.subr.mxu0 0.0
      %288 = vmatpush1.msra.mxu0 0.0
      %289 = vmatprep.subr.mxu0 0.0
      %290 = vmatpush1.msra.mxu0 0.0
      %291 = vmatprep.subr.mxu0 0.0
      %292 = vmatpush1.msra.mxu0 0.0
      %293 = vmatprep.subr.mxu0 0.0
      %294 = vmatpush1.msra.mxu0 0.0
      %295 = vmatprep.subr.mxu0 0.0
      %296 = vmatpush1.msra.mxu0 0.0
      %297 = vmatprep.subr.mxu0 0.0
      %298 = vmatpush1.msra.mxu0 0.0
      %299 = vmatprep.subr.mxu0 0.0
      %300 = vmatpush1.msra.mxu0 0.0
      %301 = vmatprep.subr.mxu0 0.0
      %302 = vmatpush1.msra.mxu0 0.0
      %303 = vmatprep.subr.mxu0 0.0
      %304 = vmatpush1.msra.mxu0 0.0
      %305 = vmatprep.subr.mxu0 0.0
      %306 = vmatpush1.msra.mxu0 0.0
      %307 = vmatprep.subr.mxu0 0.0
      %308 = vmatpush1.msra.mxu0 0.0
      %309 = vmatprep.subr.mxu0 0.0
      %310 = vmatpush1.msra.mxu0 0.0
      %311 = vmatprep.subr.mxu0 0.0
      %312 = vmatpush1.msra.mxu0 0.0
      %313 = vmatprep.subr.mxu0 0.0
      %314 = vmatpush1.msra.mxu0 0.0
      %315 = vmatprep.subr.mxu0 0.0
      %316 = vmatpush1.msra.mxu0 0.0
      %317 = vmatprep.subr.mxu0 0.0
      %318 = vmatpush1.msra.mxu0 0.0
      %319 = vmatprep.subr.mxu0 0.0
      %320 = vmatpush1.msra.mxu0 0.0
      %321 = vmatprep.subr.mxu0 0.0
      %322 = vmatpush1.msra.mxu0 0.0
      %323 = vmatprep.subr.mxu0 0.0
      %324 = vmatpush1.msra.mxu0 0.0
      %325 = vmatprep.subr.mxu0 0.0
      %326 = vmatpush1.msra.mxu0 0.0
      %327 = vmatprep.subr.mxu0 0.0
      %328 = vmatpush1.msra.mxu0 0.0
      %329 = vmatprep.subr.mxu0 0.0
      %330 = vmatpush1.msra.mxu0 0.0
      %331 = vmatprep.subr.mxu0 0.0
      %332 = vmatpush1.msra.mxu0 0.0
      %333 = vmatprep.subr.mxu0 0.0
      %334 = vmatpush1.msra.mxu0 0.0
      %335 = vmatprep.mubr.f32.mxu0 0.0
      %v336 = vand.u32 %v248, 4294901760
      %v337 = vsub.f32 %v248, %v336
      %v338 = vand.u32 %v337, 4294901760
      %v339 = vsub.f32 %v337, %v338
      %v340 = vand.u32 %v339, 4294901760
      %341 = vmatmul.mubr.f32.gmra.mrb[0].mxu0 %v340
      %v342 = vpop.f32.mrb[0].mxu0
      %v343 = vadd.f32 0.0, %v342
      %v344 = vpop.f32.mrb[0].mxu0
      %v345 = vadd.f32 0.0, %v344
      %346 = vmatprep.mubr.f32.mxu0 0.0
      %v347 = vand.u32 %v251, 4294901760
      %v348 = vsub.f32 %v251, %v347
      %v349 = vand.u32 %v348, 4294901760
      %v350 = vsub.f32 %v348, %v349
      %v351 = vand.u32 %v350, 4294901760
      %352 = vmatmul.mubr.f32.gmra.mrb[0].mxu0 %v351
      %v353 = vpop.f32.mrb[0].mxu0
      %v354 = vadd.f32 0.0, %v353
      %v355 = vpop.f32.mrb[0].mxu0
      %v356 = vadd.f32 0.0, %v355
      %357 = vmatprep.mubr.f32.mxu0 0.0
      %v358 = vand.u32 %v254, 4294901760
      %v359 = vsub.f32 %v254, %v358
      %v360 = vand.u32 %v359, 4294901760
      %v361 = vsub.f32 %v359, %v360
      %v362 = vand.u32 %v361, 4294901760
      %363 = vmatmul.mubr.f32.gmra.mrb[0].mxu0 %v362
      %v364 = vpop.f32.mrb[0].mxu0
      %v365 = vadd.f32 0.0, %v364
      %v366 = vpop.f32.mrb[0].mxu0
      %v367 = vadd.f32 0.0, %v366
      %368 = vmatprep.mubr.f32.mxu0 0.0
      %v369 = vand.u32 %v257, 4294901760
      %v370 = vsub.f32 %v257, %v369
      %v371 = vand.u32 %v370, 4294901760
      %v372 = vsub.f32 %v370, %v371
      %v373 = vand.u32 %v372, 4294901760
      %374 = vmatmul.mubr.f32.gmra.mrb[0].mxu0 %v373
      %v375 = vpop.f32.mrb[0].mxu0
      %v376 = vadd.f32 0.0, %v375
      %v377 = vpop.f32.mrb[0].mxu0
      %v378 = vadd.f32 0.0, %v377
      %379 = vdwg.mxu0
      %v380 = vand.u32 %v219, 4294901760
      %v381 = vsub.f32 %v219, %v380
      %v382 = vand.u32 %v381, 4294901760
      %v383 = vsub.f32 %v381, %v382
      %v384 = vand.u32 %v383, 4294901760
      %385 = vmatprep.subr.mxu0 %v384
      %v386 = vand.u32 %v218, 4294901760
      %v387 = vsub.f32 %v218, %v386
      %v388 = vand.u32 %v387, 4294901760
      %v389 = vsub.f32 %v387, %v388
      %v390 = vand.u32 %v389, 4294901760
      %391 = vmatpush1.msra.mxu0 %v390
      %v392 = vand.u32 %v223, 4294901760
      %v393 = vsub.f32 %v223, %v392
      %v394 = vand.u32 %v393, 4294901760
      %v395 = vsub.f32 %v393, %v394
      %v396 = vand.u32 %v395, 4294901760
      %397 = vmatprep.subr.mxu0 %v396
      %v398 = vand.u32 %v222, 4294901760
      %v399 = vsub.f32 %v222, %v398
      %v400 = vand.u32 %v399, 4294901760
      %v401 = vsub.f32 %v399, %v400
      %v402 = vand.u32 %v401, 4294901760
      %403 = vmatpush1.msra.mxu0 %v402
      %v404 = vand.u32 %v227, 4294901760
      %v405 = vsub.f32 %v227, %v404
      %v406 = vand.u32 %v405, 4294901760
      %v407 = vsub.f32 %v405, %v406
      %v408 = vand.u32 %v407, 4294901760
      %409 = vmatprep.subr.mxu0 %v408
      %v410 = vand.u32 %v226, 4294901760
      %v411 = vsub.f32 %v226, %v410
      %v412 = vand.u32 %v411, 4294901760
      %v413 = vsub.f32 %v411, %v412
      %v414 = vand.u32 %v413, 4294901760
      %415 = vmatpush1.msra.mxu0 %v414
      %v416 = vand.u32 %v231, 4294901760
      %v417 = vsub.f32 %v231, %v416
      %v418 = vand.u32 %v417, 4294901760
      %v419 = vsub.f32 %v417, %v418
      %v420 = vand.u32 %v419, 4294901760
      %421 = vmatprep.subr.mxu0 %v420
      %v422 = vand.u32 %v230, 4294901760
      %v423 = vsub.f32 %v230, %v422
      %v424 = vand.u32 %v423, 4294901760
      %v425 = vsub.f32 %v423, %v424
      %v426 = vand.u32 %v425, 4294901760
      %427 = vmatpush1.msra.mxu0 %v426
      %v428 = vand.u32 %v235, 4294901760
      %v429 = vsub.f32 %v235, %v428
      %v430 = vand.u32 %v429, 4294901760
      %v431 = vsub.f32 %v429, %v430
      %v432 = vand.u32 %v431, 4294901760
      %433 = vmatprep.subr.mxu0 %v432
      %v434 = vand.u32 %v234, 4294901760
      %v435 = vsub.f32 %v234, %v434
      %v436 = vand.u32 %v435, 4294901760
      %v437 = vsub.f32 %v435, %v436
      %v438 = vand.u32 %v437, 4294901760
      %439 = vmatpush1.msra.mxu0 %v438
      %v440 = vand.u32 %v239, 4294901760
      %v441 = vsub.f32 %v239, %v440
      %v442 = vand.u32 %v441, 4294901760
      %v443 = vsub.f32 %v441, %v442
      %v444 = vand.u32 %v443, 4294901760
      %445 = vmatprep.subr.mxu0 %v444
      %v446 = vand.u32 %v238, 4294901760
      %v447 = vsub.f32 %v238, %v446
      %v448 = vand.u32 %v447, 4294901760
      %v449 = vsub.f32 %v447, %v448
      %v450 = vand.u32 %v449, 4294901760
      %451 = vmatpush1.msra.mxu0 %v450
      %452 = vmatprep.subr.mxu0 0.0
      %453 = vmatpush1.msra.mxu0 0.0
      %454 = vmatprep.subr.mxu0 0.0
      %455 = vmatpush1.msra.mxu0 0.0
      %456 = vmatprep.subr.mxu0 0.0
      %457 = vmatpush1.msra.mxu0 0.0
      %458 = vmatprep.subr.mxu0 0.0
      %459 = vmatpush1.msra.mxu0 0.0
      %460 = vmatprep.subr.mxu0 0.0
      %461 = vmatpush1.msra.mxu0 0.0
      %462 = vmatprep.subr.mxu0 0.0
      %463 = vmatpush1.msra.mxu0 0.0
      %464 = vmatprep.subr.mxu0 0.0
      %465 = vmatpush1.msra.mxu0 0.0
      %466 = vmatprep.subr.mxu0 0.0
      %467 = vmatpush1.msra.mxu0 0.0
      %468 = vmatprep.subr.mxu0 0.0
      %469 = vmatpush1.msra.mxu0 0.0
      %470 = vmatprep.subr.mxu0 0.0
      %471 = vmatpush1.msra.mxu0 0.0
      %472 = vmatprep.subr.mxu0 0.0
      %473 = vmatpush1.msra.mxu0 0.0
      %474 = vmatprep.subr.mxu0 0.0
      %475 = vmatpush1.msra.mxu0 0.0
      %476 = vmatprep.subr.mxu0 0.0
      %477 = vmatpush1.msra.mxu0 0.0
      %478 = vmatprep.subr.mxu0 0.0
      %479 = vmatpush1.msra.mxu0 0.0
      %480 = vmatprep.subr.mxu0 0.0
      %481 = vmatpush1.msra.mxu0 0.0
      %482 = vmatprep.subr.mxu0 0.0
      %483 = vmatpush1.msra.mxu0 0.0
      %484 = vmatprep.subr.mxu0 0.0
      %485 = vmatpush1.msra.mxu0 0.0
      %486 = vmatprep.subr.mxu0 0.0
      %487 = vmatpush1.msra.mxu0 0.0
      %488 = vmatprep.subr.mxu0 0.0
      %489 = vmatpush1.msra.mxu0 0.0
      %490 = vmatprep.subr.mxu0 0.0
      %491 = vmatpush1.msra.mxu0 0.0
      %492 = vmatprep.subr.mxu0 0.0
      %493 = vmatpush1.msra.mxu0 0.0
      %494 = vmatprep.subr.mxu0 0.0
      %495 = vmatpush1.msra.mxu0 0.0
      %496 = vmatprep.subr.mxu0 0.0
      %497 = vmatpush1.msra.mxu0 0.0
      %498 = vmatprep.subr.mxu0 0.0
      %499 = vmatpush1.msra.mxu0 0.0
      %500 = vmatprep.subr.mxu0 0.0
      %501 = vmatpush1.msra.mxu0 0.0
      %502 = vmatprep.subr.mxu0 0.0
      %503 = vmatpush1.msra.mxu0 0.0
      %504 = vmatprep.mubr.f32.mxu0 0.0
      %v505 = vand.u32 %v248, 4294901760
      %506 = vmatmul.mubr.f32.gmra.mrb[0].mxu0 %v505
      %v507 = vpop.f32.mrb[0].mxu0
      %v508 = vadd.f32 %v343, %v507
      %v509 = vpop.f32.mrb[0].mxu0
      %v510 = vadd.f32 %v345, %v509
      %511 = vmatprep.mubr.f32.mxu0 0.0
      %v512 = vand.u32 %v251, 4294901760
      %513 = vmatmul.mubr.f32.gmra.mrb[0].mxu0 %v512
      %v514 = vpop.f32.mrb[0].mxu0
      %v515 = vadd.f32 %v354, %v514
      %v516 = vpop.f32.mrb[0].mxu0
      %v517 = vadd.f32 %v356, %v516
      %518 = vmatprep.mubr.f32.mxu0 0.0
      %v519 = vand.u32 %v254, 4294901760
      %520 = vmatmul.mubr.f32.gmra.mrb[0].mxu0 %v519
      %v521 = vpop.f32.mrb[0].mxu0
      %v522 = vadd.f32 %v365, %v521
      %v523 = vpop.f32.mrb[0].mxu0
      %v524 = vadd.f32 %v367, %v523
      %525 = vmatprep.mubr.f32.mxu0 0.0
      %v526 = vand.u32 %v257, 4294901760
      %527 = vmatmul.mubr.f32.gmra.mrb[0].mxu0 %v526
      %v528 = vpop.f32.mrb[0].mxu0
      %v529 = vadd.f32 %v376, %v528
      %v530 = vpop.f32.mrb[0].mxu0
      %v531 = vadd.f32 %v378, %v530
      %532 = vdwg.mxu0
      %v533 = vand.u32 %v219, 4294901760
      %v534 = vsub.f32 %v219, %v533
      %535 = vmatprep.subr.mxu0 %v534
      %v536 = vand.u32 %v218, 4294901760
      %v537 = vsub.f32 %v218, %v536
      %538 = vmatpush1.msra.mxu0 %v537
      %v539 = vand.u32 %v223, 4294901760
      %v540 = vsub.f32 %v223, %v539
      %541 = vmatprep.subr.mxu0 %v540
      %v542 = vand.u32 %v222, 4294901760
      %v543 = vsub.f32 %v222, %v542
      %544 = vmatpush1.msra.mxu0 %v543
      %v545 = vand.u32 %v227, 4294901760
      %v546 = vsub.f32 %v227, %v545
      %547 = vmatprep.subr.mxu0 %v546
      %v548 = vand.u32 %v226, 4294901760
      %v549 = vsub.f32 %v226, %v548
      %550 = vmatpush1.msra.mxu0 %v549
      %v551 = vand.u32 %v231, 4294901760
      %v552 = vsub.f32 %v231, %v551
      %553 = vmatprep.subr.mxu0 %v552
      %v554 = vand.u32 %v230, 4294901760
      %v555 = vsub.f32 %v230, %v554
      %556 = vmatpush1.msra.mxu0 %v555
      %v557 = vand.u32 %v235, 4294901760
      %v558 = vsub.f32 %v235, %v557
      %559 = vmatprep.subr.mxu0 %v558
      %v560 = vand.u32 %v234, 4294901760
      %v561 = vsub.f32 %v234, %v560
      %562 = vmatpush1.msra.mxu0 %v561
      %v563 = vand.u32 %v239, 4294901760
      %v564 = vsub.f32 %v239, %v563
      %565 = vmatprep.subr.mxu0 %v564
      %v566 = vand.u32 %v238, 4294901760
      %v567 = vsub.f32 %v238, %v566
      %568 = vmatpush1.msra.mxu0 %v567
      %569 = vmatprep.subr.mxu0 0.0
      %570 = vmatpush1.msra.mxu0 0.0
      %571 = vmatprep.subr.mxu0 0.0
      %572 = vmatpush1.msra.mxu0 0.0
      %573 = vmatprep.subr.mxu0 0.0
      %574 = vmatpush1.msra.mxu0 0.0
      %575 = vmatprep.subr.mxu0 0.0
      %576 = vmatpush1.msra.mxu0 0.0
      %577 = vmatprep.subr.mxu0 0.0
      %578 = vmatpush1.msra.mxu0 0.0
      %579 = vmatprep.subr.mxu0 0.0
      %580 = vmatpush1.msra.mxu0 0.0
      %581 = vmatprep.subr.mxu0 0.0
      %582 = vmatpush1.msra.mxu0 0.0
      %583 = vmatprep.subr.mxu0 0.0
      %584 = vmatpush1.msra.mxu0 0.0
      %585 = vmatprep.subr.mxu0 0.0
      %586 = vmatpush1.msra.mxu0 0.0
      %587 = vmatprep.subr.mxu0 0.0
      %588 = vmatpush1.msra.mxu0 0.0
      %589 = vmatprep.subr.mxu0 0.0
      %590 = vmatpush1.msra.mxu0 0.0
      %591 = vmatprep.subr.mxu0 0.0
      %592 = vmatpush1.msra.mxu0 0.0
      %593 = vmatprep.subr.mxu0 0.0
      %594 = vmatpush1.msra.mxu0 0.0
      %595 = vmatprep.subr.mxu0 0.0
      %596 = vmatpush1.msra.mxu0 0.0
      %597 = vmatprep.subr.mxu0 0.0
      %598 = vmatpush1.msra.mxu0 0.0
      %599 = vmatprep.subr.mxu0 0.0
      %600 = vmatpush1.msra.mxu0 0.0
      %601 = vmatprep.subr.mxu0 0.0
      %602 = vmatpush1.msra.mxu0 0.0
      %603 = vmatprep.subr.mxu0 0.0
      %604 = vmatpush1.msra.mxu0 0.0
      %605 = vmatprep.subr.mxu0 0.0
      %606 = vmatpush1.msra.mxu0 0.0
      %607 = vmatprep.subr.mxu0 0.0
      %608 = vmatpush1.msra.mxu0 0.0
      %609 = vmatprep.subr.mxu0 0.0
      %610 = vmatpush1.msra.mxu0 0.0
      %611 = vmatprep.subr.mxu0 0.0
      %612 = vmatpush1.msra.mxu0 0.0
      %613 = vmatprep.subr.mxu0 0.0
      %614 = vmatpush1.msra.mxu0 0.0
      %615 = vmatprep.subr.mxu0 0.0
      %616 = vmatpush1.msra.mxu0 0.0
      %617 = vmatprep.subr.mxu0 0.0
      %618 = vmatpush1.msra.mxu0 0.0
      %619 = vmatprep.subr.mxu0 0.0
      %620 = vmatpush1.msra.mxu0 0.0
      %621 = vmatprep.mubr.f32.mxu0 0.0
      %v622 = vand.u32 %v248, 4294901760
      %v623 = vsub.f32 %v248, %v622
      %624 = vmatmul.mubr.f32.gmra.mrb[0].mxu0 %v623
      %v625 = vpop.f32.mrb[0].mxu0
      %v626 = vadd.f32 %v508, %v625
      %v627 = vpop.f32.mrb[0].mxu0
      %v628 = vadd.f32 %v510, %v627
      %629 = vmatprep.mubr.f32.mxu0 0.0
      %v630 = vand.u32 %v251, 4294901760
      %v631 = vsub.f32 %v251, %v630
      %632 = vmatmul.mubr.f32.gmra.mrb[0].mxu0 %v631
      %v633 = vpop.f32.mrb[0].mxu0
      %v634 = vadd.f32 %v515, %v633
      %v635 = vpop.f32.mrb[0].mxu0
      %v636 = vadd.f32 %v517, %v635
      %637 = vmatprep.mubr.f32.mxu0 0.0
      %v638 = vand.u32 %v254, 4294901760
      %v639 = vsub.f32 %v254, %v638
      %640 = vmatmul.mubr.f32.gmra.mrb[0].mxu0 %v639
      %v641 = vpop.f32.mrb[0].mxu0
      %v642 = vadd.f32 %v522, %v641
      %v643 = vpop.f32.mrb[0].mxu0
      %v644 = vadd.f32 %v524, %v643
      %645 = vmatprep.mubr.f32.mxu0 0.0
      %v646 = vand.u32 %v257, 4294901760
      %v647 = vsub.f32 %v257, %v646
      %648 = vmatmul.mubr.f32.gmra.mrb[0].mxu0 %v647
      %v649 = vpop.f32.mrb[0].mxu0
      %v650 = vadd.f32 %v529, %v649
      %v651 = vpop.f32.mrb[0].mxu0
      %v652 = vadd.f32 %v531, %v651
      %653 = vdwg.mxu0
      %v654 = vand.u32 %v219, 4294901760
      %655 = vmatprep.subr.mxu0 %v654
      %v656 = vand.u32 %v218, 4294901760
      %657 = vmatpush1.msra.mxu0 %v656
      %v658 = vand.u32 %v223, 4294901760
      %659 = vmatprep.subr.mxu0 %v658
      %v660 = vand.u32 %v222, 4294901760
      %661 = vmatpush1.msra.mxu0 %v660
      %v662 = vand.u32 %v227, 4294901760
      %663 = vmatprep.subr.mxu0 %v662
      %v664 = vand.u32 %v226, 4294901760
      %665 = vmatpush1.msra.mxu0 %v664
      %v666 = vand.u32 %v231, 4294901760
      %667 = vmatprep.subr.mxu0 %v666
      %v668 = vand.u32 %v230, 4294901760
      %669 = vmatpush1.msra.mxu0 %v668
      %v670 = vand.u32 %v235, 4294901760
      %671 = vmatprep.subr.mxu0 %v670
      %v672 = vand.u32 %v234, 4294901760
      %673 = vmatpush1.msra.mxu0 %v672
      %v674 = vand.u32 %v239, 4294901760
      %675 = vmatprep.subr.mxu0 %v674
      %v676 = vand.u32 %v238, 4294901760
      %677 = vmatpush1.msra.mxu0 %v676
      %678 = vmatprep.subr.mxu0 0.0
      %679 = vmatpush1.msra.mxu0 0.0
      %680 = vmatprep.subr.mxu0 0.0
      %681 = vmatpush1.msra.mxu0 0.0
      %682 = vmatprep.subr.mxu0 0.0
      %683 = vmatpush1.msra.mxu0 0.0
      %684 = vmatprep.subr.mxu0 0.0
      %685 = vmatpush1.msra.mxu0 0.0
      %686 = vmatprep.subr.mxu0 0.0
      %687 = vmatpush1.msra.mxu0 0.0
      %688 = vmatprep.subr.mxu0 0.0
      %689 = vmatpush1.msra.mxu0 0.0
      %690 = vmatprep.subr.mxu0 0.0
      %691 = vmatpush1.msra.mxu0 0.0
      %692 = vmatprep.subr.mxu0 0.0
      %693 = vmatpush1.msra.mxu0 0.0
      %694 = vmatprep.subr.mxu0 0.0
      %695 = vmatpush1.msra.mxu0 0.0
      %696 = vmatprep.subr.mxu0 0.0
      %697 = vmatpush1.msra.mxu0 0.0
      %698 = vmatprep.subr.mxu0 0.0
      %699 = vmatpush1.msra.mxu0 0.0
      %700 = vmatprep.subr.mxu0 0.0
      %701 = vmatpush1.msra.mxu0 0.0
      %702 = vmatprep.subr.mxu0 0.0
      %703 = vmatpush1.msra.mxu0 0.0
      %704 = vmatprep.subr.mxu0 0.0
      %705 = vmatpush1.msra.mxu0 0.0
      %706 = vmatprep.subr.mxu0 0.0
      %707 = vmatpush1.msra.mxu0 0.0
      %708 = vmatprep.subr.mxu0 0.0
      %709 = vmatpush1.msra.mxu0 0.0
      %710 = vmatprep.subr.mxu0 0.0
      %711 = vmatpush1.msra.mxu0 0.0
      %712 = vmatprep.subr.mxu0 0.0
      %713 = vmatpush1.msra.mxu0 0.0
      %714 = vmatprep.subr.mxu0 0.0
      %715 = vmatpush1.msra.mxu0 0.0
      %716 = vmatprep.subr.mxu0 0.0
      %717 = vmatpush1.msra.mxu0 0.0
      %718 = vmatprep.subr.mxu0 0.0
      %719 = vmatpush1.msra.mxu0 0.0
      %720 = vmatprep.subr.mxu0 0.0
      %721 = vmatpush1.msra.mxu0 0.0
      %722 = vmatprep.subr.mxu0 0.0
      %723 = vmatpush1.msra.mxu0 0.0
      %724 = vmatprep.subr.mxu0 0.0
      %725 = vmatpush1.msra.mxu0 0.0
      %726 = vmatprep.subr.mxu0 0.0
      %727 = vmatpush1.msra.mxu0 0.0
      %728 = vmatprep.subr.mxu0 0.0
      %729 = vmatpush1.msra.mxu0 0.0
      %730 = vmatprep.mubr.f32.mxu0 0.0
      %v731 = vand.u32 %v248, 4294901760
      %v732 = vsub.f32 %v248, %v731
      %v733 = vand.u32 %v732, 4294901760
      %734 = vmatmul.mubr.f32.gmra.mrb[0].mxu0 %v733
      %v735 = vpop.f32.mrb[0].mxu0
      %v736 = vadd.f32 %v626, %v735
      %v737 = vpop.f32.mrb[0].mxu0
      %v738 = vadd.f32 %v628, %v737
      %739 = vmatprep.mubr.f32.mxu0 0.0
      %v740 = vand.u32 %v251, 4294901760
      %v741 = vsub.f32 %v251, %v740
      %v742 = vand.u32 %v741, 4294901760
      %743 = vmatmul.mubr.f32.gmra.mrb[0].mxu0 %v742
      %v744 = vpop.f32.mrb[0].mxu0
      %v745 = vadd.f32 %v634, %v744
      %v746 = vpop.f32.mrb[0].mxu0
      %v747 = vadd.f32 %v636, %v746
      %748 = vmatprep.mubr.f32.mxu0 0.0
      %v749 = vand.u32 %v254, 4294901760
      %v750 = vsub.f32 %v254, %v749
      %v751 = vand.u32 %v750, 4294901760
      %752 = vmatmul.mubr.f32.gmra.mrb[0].mxu0 %v751
      %v753 = vpop.f32.mrb[0].mxu0
      %v754 = vadd.f32 %v642, %v753
      %v755 = vpop.f32.mrb[0].mxu0
      %v756 = vadd.f32 %v644, %v755
      %757 = vmatprep.mubr.f32.mxu0 0.0
      %v758 = vand.u32 %v257, 4294901760
      %v759 = vsub.f32 %v257, %v758
      %v760 = vand.u32 %v759, 4294901760
      %761 = vmatmul.mubr.f32.gmra.mrb[0].mxu0 %v760
      %v762 = vpop.f32.mrb[0].mxu0
      %v763 = vadd.f32 %v650, %v762
      %v764 = vpop.f32.mrb[0].mxu0
      %v765 = vadd.f32 %v652, %v764
      %766 = vdwg.mxu0
      %v767 = vand.u32 %v219, 4294901760
      %v768 = vsub.f32 %v219, %v767
      %v769 = vand.u32 %v768, 4294901760
      %770 = vmatprep.subr.mxu0 %v769
      %v771 = vand.u32 %v218, 4294901760
      %v772 = vsub.f32 %v218, %v771
      %v773 = vand.u32 %v772, 4294901760
      %774 = vmatpush1.msra.mxu0 %v773
      %v775 = vand.u32 %v223, 4294901760
      %v776 = vsub.f32 %v223, %v775
      %v777 = vand.u32 %v776, 4294901760
      %778 = vmatprep.subr.mxu0 %v777
      %v779 = vand.u32 %v222, 4294901760
      %v780 = vsub.f32 %v222, %v779
      %v781 = vand.u32 %v780, 4294901760
      %782 = vmatpush1.msra.mxu0 %v781
      %v783 = vand.u32 %v227, 4294901760
      %v784 = vsub.f32 %v227, %v783
      %v785 = vand.u32 %v784, 4294901760
      %786 = vmatprep.subr.mxu0 %v785
      %v787 = vand.u32 %v226, 4294901760
      %v788 = vsub.f32 %v226, %v787
      %v789 = vand.u32 %v788, 4294901760
      %790 = vmatpush1.msra.mxu0 %v789
      %v791 = vand.u32 %v231, 4294901760
      %v792 = vsub.f32 %v231, %v791
      %v793 = vand.u32 %v792, 4294901760
      %794 = vmatprep.subr.mxu0 %v793
      %v795 = vand.u32 %v230, 4294901760
      %v796 = vsub.f32 %v230, %v795
      %v797 = vand.u32 %v796, 4294901760
      %798 = vmatpush1.msra.mxu0 %v797
      %v799 = vand.u32 %v235, 4294901760
      %v800 = vsub.f32 %v235, %v799
      %v801 = vand.u32 %v800, 4294901760
      %802 = vmatprep.subr.mxu0 %v801
      %v803 = vand.u32 %v234, 4294901760
      %v804 = vsub.f32 %v234, %v803
      %v805 = vand.u32 %v804, 4294901760
      %806 = vmatpush1.msra.mxu0 %v805
      %v807 = vand.u32 %v239, 4294901760
      %v808 = vsub.f32 %v239, %v807
      %v809 = vand.u32 %v808, 4294901760
      %810 = vmatprep.subr.mxu0 %v809
      %v811 = vand.u32 %v238, 4294901760
      %v812 = vsub.f32 %v238, %v811
      %v813 = vand.u32 %v812, 4294901760
      %814 = vmatpush1.msra.mxu0 %v813
      %815 = vmatprep.subr.mxu0 0.0
      %816 = vmatpush1.msra.mxu0 0.0
      %817 = vmatprep.subr.mxu0 0.0
      %818 = vmatpush1.msra.mxu0 0.0
      %819 = vmatprep.subr.mxu0 0.0
      %820 = vmatpush1.msra.mxu0 0.0
      %821 = vmatprep.subr.mxu0 0.0
      %822 = vmatpush1.msra.mxu0 0.0
      %823 = vmatprep.subr.mxu0 0.0
      %824 = vmatpush1.msra.mxu0 0.0
      %825 = vmatprep.subr.mxu0 0.0
      %826 = vmatpush1.msra.mxu0 0.0
      %827 = vmatprep.subr.mxu0 0.0
      %828 = vmatpush1.msra.mxu0 0.0
      %829 = vmatprep.subr.mxu0 0.0
      %830 = vmatpush1.msra.mxu0 0.0
      %831 = vmatprep.subr.mxu0 0.0
      %832 = vmatpush1.msra.mxu0 0.0
      %833 = vmatprep.subr.mxu0 0.0
      %834 = vmatpush1.msra.mxu0 0.0
      %835 = vmatprep.subr.mxu0 0.0
      %836 = vmatpush1.msra.mxu0 0.0
      %837 = vmatprep.subr.mxu0 0.0
      %838 = vmatpush1.msra.mxu0 0.0
      %839 = vmatprep.subr.mxu0 0.0
      %840 = vmatpush1.msra.mxu0 0.0
      %841 = vmatprep.subr.mxu0 0.0
      %842 = vmatpush1.msra.mxu0 0.0
      %843 = vmatprep.subr.mxu0 0.0
      %844 = vmatpush1.msra.mxu0 0.0
      %845 = vmatprep.subr.mxu0 0.0
      %846 = vmatpush1.msra.mxu0 0.0
      %847 = vmatprep.subr.mxu0 0.0
      %848 = vmatpush1.msra.mxu0 0.0
      %849 = vmatprep.subr.mxu0 0.0
      %850 = vmatpush1.msra.mxu0 0.0
      %851 = vmatprep.subr.mxu0 0.0
      %852 = vmatpush1.msra.mxu0 0.0
      %853 = vmatprep.subr.mxu0 0.0
      %854 = vmatpush1.msra.mxu0 0.0
      %855 = vmatprep.subr.mxu0 0.0
      %856 = vmatpush1.msra.mxu0 0.0
      %857 = vmatprep.subr.mxu0 0.0
      %858 = vmatpush1.msra.mxu0 0.0
      %859 = vmatprep.subr.mxu0 0.0
      %860 = vmatpush1.msra.mxu0 0.0
      %861 = vmatprep.subr.mxu0 0.0
      %862 = vmatpush1.msra.mxu0 0.0
      %863 = vmatprep.subr.mxu0 0.0
      %864 = vmatpush1.msra.mxu0 0.0
      %865 = vmatprep.subr.mxu0 0.0
      %866 = vmatpush1.msra.mxu0 0.0
      %867 = vmatprep.mubr.f32.mxu0 0.0
      %v868 = vand.u32 %v248, 4294901760
      %869 = vmatmul.mubr.f32.gmra.mrb[0].mxu0 %v868
      %v870 = vpop.f32.mrb[0].mxu0
      %v871 = vadd.f32 %v736, %v870
      %v872 = vpop.f32.mrb[0].mxu0
      %v873 = vadd.f32 %v738, %v872
      %874 = vmatprep.mubr.f32.mxu0 0.0
      %v875 = vand.u32 %v251, 4294901760
      %876 = vmatmul.mubr.f32.gmra.mrb[0].mxu0 %v875
      %v877 = vpop.f32.mrb[0].mxu0
      %v878 = vadd.f32 %v745, %v877
      %v879 = vpop.f32.mrb[0].mxu0
      %v880 = vadd.f32 %v747, %v879
      %881 = vmatprep.mubr.f32.mxu0 0.0
      %v882 = vand.u32 %v254, 4294901760
      %883 = vmatmul.mubr.f32.gmra.mrb[0].mxu0 %v882
      %v884 = vpop.f32.mrb[0].mxu0
      %v885 = vadd.f32 %v754, %v884
      %v886 = vpop.f32.mrb[0].mxu0
      %v887 = vadd.f32 %v756, %v886
      %888 = vmatprep.mubr.f32.mxu0 0.0
      %v889 = vand.u32 %v257, 4294901760
      %890 = vmatmul.mubr.f32.gmra.mrb[0].mxu0 %v889
      %v891 = vpop.f32.mrb[0].mxu0
      %v892 = vadd.f32 %v763, %v891
      %v893 = vpop.f32.mrb[0].mxu0
      %v894 = vadd.f32 %v765, %v893
      %895 = vdwg.mxu0
      %v896 = vand.u32 %v219, 4294901760
      %897 = vmatprep.subr.mxu0 %v896
      %v898 = vand.u32 %v218, 4294901760
      %899 = vmatpush1.msra.mxu0 %v898
      %v900 = vand.u32 %v223, 4294901760
      %901 = vmatprep.subr.mxu0 %v900
      %v902 = vand.u32 %v222, 4294901760
      %903 = vmatpush1.msra.mxu0 %v902
      %v904 = vand.u32 %v227, 4294901760
      %905 = vmatprep.subr.mxu0 %v904
      %v906 = vand.u32 %v226, 4294901760
      %907 = vmatpush1.msra.mxu0 %v906
      %v908 = vand.u32 %v231, 4294901760
      %909 = vmatprep.subr.mxu0 %v908
      %v910 = vand.u32 %v230, 4294901760
      %911 = vmatpush1.msra.mxu0 %v910
      %v912 = vand.u32 %v235, 4294901760
      %913 = vmatprep.subr.mxu0 %v912
      %v914 = vand.u32 %v234, 4294901760
      %915 = vmatpush1.msra.mxu0 %v914
      %v916 = vand.u32 %v239, 4294901760
      %917 = vmatprep.subr.mxu0 %v916
      %v918 = vand.u32 %v238, 4294901760
      %919 = vmatpush1.msra.mxu0 %v918
      %920 = vmatprep.subr.mxu0 0.0
      %921 = vmatpush1.msra.mxu0 0.0
      %922 = vmatprep.subr.mxu0 0.0
      %923 = vmatpush1.msra.mxu0 0.0
      %924 = vmatprep.subr.mxu0 0.0
      %925 = vmatpush1.msra.mxu0 0.0
      %926 = vmatprep.subr.mxu0 0.0
      %927 = vmatpush1.msra.mxu0 0.0
      %928 = vmatprep.subr.mxu0 0.0
      %929 = vmatpush1.msra.mxu0 0.0
      %930 = vmatprep.subr.mxu0 0.0
      %931 = vmatpush1.msra.mxu0 0.0
      %932 = vmatprep.subr.mxu0 0.0
      %933 = vmatpush1.msra.mxu0 0.0
      %934 = vmatprep.subr.mxu0 0.0
      %935 = vmatpush1.msra.mxu0 0.0
      %936 = vmatprep.subr.mxu0 0.0
      %937 = vmatpush1.msra.mxu0 0.0
      %938 = vmatprep.subr.mxu0 0.0
      %939 = vmatpush1.msra.mxu0 0.0
      %940 = vmatprep.subr.mxu0 0.0
      %941 = vmatpush1.msra.mxu0 0.0
      %942 = vmatprep.subr.mxu0 0.0
      %943 = vmatpush1.msra.mxu0 0.0
      %944 = vmatprep.subr.mxu0 0.0
      %945 = vmatpush1.msra.mxu0 0.0
      %946 = vmatprep.subr.mxu0 0.0
      %947 = vmatpush1.msra.mxu0 0.0
      %948 = vmatprep.subr.mxu0 0.0
      %949 = vmatpush1.msra.mxu0 0.0
      %950 = vmatprep.subr.mxu0 0.0
      %951 = vmatpush1.msra.mxu0 0.0
      %952 = vmatprep.subr.mxu0 0.0
      %953 = vmatpush1.msra.mxu0 0.0
      %954 = vmatprep.subr.mxu0 0.0
      %955 = vmatpush1.msra.mxu0 0.0
      %956 = vmatprep.subr.mxu0 0.0
      %957 = vmatpush1.msra.mxu0 0.0
      %958 = vmatprep.subr.mxu0 0.0
      %959 = vmatpush1.msra.mxu0 0.0
      %960 = vmatprep.subr.mxu0 0.0
      %961 = vmatpush1.msra.mxu0 0.0
      %962 = vmatprep.subr.mxu0 0.0
      %963 = vmatpush1.msra.mxu0 0.0
      %964 = vmatprep.subr.mxu0 0.0
      %965 = vmatpush1.msra.mxu0 0.0
      %966 = vmatprep.subr.mxu0 0.0
      %967 = vmatpush1.msra.mxu0 0.0
      %968 = vmatprep.subr.mxu0 0.0
      %969 = vmatpush1.msra.mxu0 0.0
      %970 = vmatprep.subr.mxu0 0.0
      %971 = vmatpush1.msra.mxu0 0.0
      %972 = vmatprep.mubr.f32.mxu0 0.0
      %v973 = vand.u32 %v248, 4294901760
      %974 = vmatmul.mubr.f32.gmra.mrb[0].mxu0 %v973
      %v975 = vpop.f32.mrb[0].mxu0
      %v976 = vadd.f32 %v871, %v975
      %v977 = vpop.f32.mrb[0].mxu0
      %v978 = vadd.f32 %v873, %v977
      %979 = vmatprep.mubr.f32.mxu0 0.0
      %v980 = vand.u32 %v251, 4294901760
      %981 = vmatmul.mubr.f32.gmra.mrb[0].mxu0 %v980
      %v982 = vpop.f32.mrb[0].mxu0
      %v983 = vadd.f32 %v878, %v982
      %v984 = vpop.f32.mrb[0].mxu0
      %v985 = vadd.f32 %v880, %v984
      %986 = vmatprep.mubr.f32.mxu0 0.0
      %v987 = vand.u32 %v254, 4294901760
      %988 = vmatmul.mubr.f32.gmra.mrb[0].mxu0 %v987
      %v989 = vpop.f32.mrb[0].mxu0
      %v990 = vadd.f32 %v885, %v989
      %v991 = vpop.f32.mrb[0].mxu0
      %v992 = vadd.f32 %v887, %v991
      %993 = vmatprep.mubr.f32.mxu0 0.0
      %v994 = vand.u32 %v257, 4294901760
      %995 = vmatmul.mubr.f32.gmra.mrb[0].mxu0 %v994
      %v996 = vpop.f32.mrb[0].mxu0
      %v997 = vadd.f32 %v892, %v996
      %v998 = vpop.f32.mrb[0].mxu0
      %v999 = vadd.f32 %v894, %v998
      %1000 = vdwg.mxu0
      %v1001 = vand.u32 %v221, 4294901760
      %1002 = vmatprep.subr.mxu0 %v1001
      %v1003 = vand.u32 %v220, 4294901760
      %1004 = vmatpush1.msra.mxu0 %v1003
      %v1005 = vand.u32 %v225, 4294901760
      %1006 = vmatprep.subr.mxu0 %v1005
      %v1007 = vand.u32 %v224, 4294901760
      %1008 = vmatpush1.msra.mxu0 %v1007
      %v1009 = vand.u32 %v229, 4294901760
      %1010 = vmatprep.subr.mxu0 %v1009
      %v1011 = vand.u32 %v228, 4294901760
      %1012 = vmatpush1.msra.mxu0 %v1011
      %v1013 = vand.u32 %v233, 4294901760
      %1014 = vmatprep.subr.mxu0 %v1013
      %v1015 = vand.u32 %v232, 4294901760
      %1016 = vmatpush1.msra.mxu0 %v1015
      %v1017 = vand.u32 %v237, 4294901760
      %1018 = vmatprep.subr.mxu0 %v1017
      %v1019 = vand.u32 %v236, 4294901760
      %1020 = vmatpush1.msra.mxu0 %v1019
      %v1021 = vand.u32 %v241, 4294901760
      %1022 = vmatprep.subr.mxu0 %v1021
      %v1023 = vand.u32 %v240, 4294901760
      %1024 = vmatpush1.msra.mxu0 %v1023
      %1025 = vmatprep.subr.mxu0 0.0
      %1026 = vmatpush1.msra.mxu0 0.0
      %1027 = vmatprep.subr.mxu0 0.0
      %1028 = vmatpush1.msra.mxu0 0.0
      %1029 = vmatprep.subr.mxu0 0.0
      %1030 = vmatpush1.msra.mxu0 0.0
      %1031 = vmatprep.subr.mxu0 0.0
      %1032 = vmatpush1.msra.mxu0 0.0
      %1033 = vmatprep.subr.mxu0 0.0
      %1034 = vmatpush1.msra.mxu0 0.0
      %1035 = vmatprep.subr.mxu0 0.0
      %1036 = vmatpush1.msra.mxu0 0.0
      %1037 = vmatprep.subr.mxu0 0.0
      %1038 = vmatpush1.msra.mxu0 0.0
      %1039 = vmatprep.subr.mxu0 0.0
      %1040 = vmatpush1.msra.mxu0 0.0
      %1041 = vmatprep.subr.mxu0 0.0
      %1042 = vmatpush1.msra.mxu0 0.0
      %1043 = vmatprep.subr.mxu0 0.0
      %1044 = vmatpush1.msra.mxu0 0.0
      %1045 = vmatprep.subr.mxu0 0.0
      %1046 = vmatpush1.msra.mxu0 0.0
      %1047 = vmatprep.subr.mxu0 0.0
      %1048 = vmatpush1.msra.mxu0 0.0
      %1049 = vmatprep.subr.mxu0 0.0
      %1050 = vmatpush1.msra.mxu0 0.0
      %1051 = vmatprep.subr.mxu0 0.0
      %1052 = vmatpush1.msra.mxu0 0.0
      %1053 = vmatprep.subr.mxu0 0.0
      %1054 = vmatpush1.msra.mxu0 0.0
      %1055 = vmatprep.subr.mxu0 0.0
      %1056 = vmatpush1.msra.mxu0 0.0
      %1057 = vmatprep.subr.mxu0 0.0
      %1058 = vmatpush1.msra.mxu0 0.0
      %1059 = vmatprep.subr.mxu0 0.0
      %1060 = vmatpush1.msra.mxu0 0.0
      %1061 = vmatprep.subr.mxu0 0.0
      %1062 = vmatpush1.msra.mxu0 0.0
      %1063 = vmatprep.subr.mxu0 0.0
      %1064 = vmatpush1.msra.mxu0 0.0
      %1065 = vmatprep.subr.mxu0 0.0
      %1066 = vmatpush1.msra.mxu0 0.0
      %1067 = vmatprep.subr.mxu0 0.0
      %1068 = vmatpush1.msra.mxu0 0.0
      %1069 = vmatprep.subr.mxu0 0.0
      %1070 = vmatpush1.msra.mxu0 0.0
      %1071 = vmatprep.subr.mxu0 0.0
      %1072 = vmatpush1.msra.mxu0 0.0
      %1073 = vmatprep.subr.mxu0 0.0
      %1074 = vmatpush1.msra.mxu0 0.0
      %1075 = vmatprep.subr.mxu0 0.0
      %1076 = vmatpush1.msra.mxu0 0.0
      %1077 = vmatprep.mubr.f32.mxu0 0.0
      %v1078 = vand.u32 %v248, 4294901760
      %v1079 = vsub.f32 %v248, %v1078
      %v1080 = vand.u32 %v1079, 4294901760
      %v1081 = vsub.f32 %v1079, %v1080
      %v1082 = vand.u32 %v1081, 4294901760
      %1083 = vmatmul.mubr.f32.gmra.mrb[0].mxu0 %v1082
      %v1084 = vpop.f32.mrb[0].mxu0
      %v1085 = vadd.f32 0.0, %v1084
      %v1086 = vpop.f32.mrb[0].mxu0
      %v1087 = vadd.f32 0.0, %v1086
      %1088 = vmatprep.mubr.f32.mxu0 0.0
      %v1089 = vand.u32 %v251, 4294901760
      %v1090 = vsub.f32 %v251, %v1089
      %v1091 = vand.u32 %v1090, 4294901760
      %v1092 = vsub.f32 %v1090, %v1091
      %v1093 = vand.u32 %v1092, 4294901760
      %1094 = vmatmul.mubr.f32.gmra.mrb[0].mxu0 %v1093
      %v1095 = vpop.f32.mrb[0].mxu0
      %v1096 = vadd.f32 0.0, %v1095
      %v1097 = vpop.f32.mrb[0].mxu0
      %v1098 = vadd.f32 0.0, %v1097
      %1099 = vmatprep.mubr.f32.mxu0 0.0
      %v1100 = vand.u32 %v254, 4294901760
      %v1101 = vsub.f32 %v254, %v1100
      %v1102 = vand.u32 %v1101, 4294901760
      %v1103 = vsub.f32 %v1101, %v1102
      %v1104 = vand.u32 %v1103, 4294901760
      %1105 = vmatmul.mubr.f32.gmra.mrb[0].mxu0 %v1104
      %v1106 = vpop.f32.mrb[0].mxu0
      %v1107 = vadd.f32 0.0, %v1106
      %v1108 = vpop.f32.mrb[0].mxu0
      %v1109 = vadd.f32 0.0, %v1108
      %1110 = vmatprep.mubr.f32.mxu0 0.0
      %v1111 = vand.u32 %v257, 4294901760
      %v1112 = vsub.f32 %v257, %v1111
      %v1113 = vand.u32 %v1112, 4294901760
      %v1114 = vsub.f32 %v1112, %v1113
      %v1115 = vand.u32 %v1114, 4294901760
      %1116 = vmatmul.mubr.f32.gmra.mrb[0].mxu0 %v1115
      %v1117 = vpop.f32.mrb[0].mxu0
      %v1118 = vadd.f32 0.0, %v1117
      %v1119 = vpop.f32.mrb[0].mxu0
      %v1120 = vadd.f32 0.0, %v1119
      %1121 = vdwg.mxu0
      %v1122 = vand.u32 %v221, 4294901760
      %v1123 = vsub.f32 %v221, %v1122
      %v1124 = vand.u32 %v1123, 4294901760
      %v1125 = vsub.f32 %v1123, %v1124
      %v1126 = vand.u32 %v1125, 4294901760
      %1127 = vmatprep.subr.mxu0 %v1126
      %v1128 = vand.u32 %v220, 4294901760
      %v1129 = vsub.f32 %v220, %v1128
      %v1130 = vand.u32 %v1129, 4294901760
      %v1131 = vsub.f32 %v1129, %v1130
      %v1132 = vand.u32 %v1131, 4294901760
      %1133 = vmatpush1.msra.mxu0 %v1132
      %v1134 = vand.u32 %v225, 4294901760
      %v1135 = vsub.f32 %v225, %v1134
      %v1136 = vand.u32 %v1135, 4294901760
      %v1137 = vsub.f32 %v1135, %v1136
      %v1138 = vand.u32 %v1137, 4294901760
      %1139 = vmatprep.subr.mxu0 %v1138
      %v1140 = vand.u32 %v224, 4294901760
      %v1141 = vsub.f32 %v224, %v1140
      %v1142 = vand.u32 %v1141, 4294901760
      %v1143 = vsub.f32 %v1141, %v1142
      %v1144 = vand.u32 %v1143, 4294901760
      %1145 = vmatpush1.msra.mxu0 %v1144
      %v1146 = vand.u32 %v229, 4294901760
      %v1147 = vsub.f32 %v229, %v1146
      %v1148 = vand.u32 %v1147, 4294901760
      %v1149 = vsub.f32 %v1147, %v1148
      %v1150 = vand.u32 %v1149, 4294901760
      %1151 = vmatprep.subr.mxu0 %v1150
      %v1152 = vand.u32 %v228, 4294901760
      %v1153 = vsub.f32 %v228, %v1152
      %v1154 = vand.u32 %v1153, 4294901760
      %v1155 = vsub.f32 %v1153, %v1154
      %v1156 = vand.u32 %v1155, 4294901760
      %1157 = vmatpush1.msra.mxu0 %v1156
      %v1158 = vand.u32 %v233, 4294901760
      %v1159 = vsub.f32 %v233, %v1158
      %v1160 = vand.u32 %v1159, 4294901760
      %v1161 = vsub.f32 %v1159, %v1160
      %v1162 = vand.u32 %v1161, 4294901760
      %1163 = vmatprep.subr.mxu0 %v1162
      %v1164 = vand.u32 %v232, 4294901760
      %v1165 = vsub.f32 %v232, %v1164
      %v1166 = vand.u32 %v1165, 4294901760
      %v1167 = vsub.f32 %v1165, %v1166
      %v1168 = vand.u32 %v1167, 4294901760
      %1169 = vmatpush1.msra.mxu0 %v1168
      %v1170 = vand.u32 %v237, 4294901760
      %v1171 = vsub.f32 %v237, %v1170
      %v1172 = vand.u32 %v1171, 4294901760
      %v1173 = vsub.f32 %v1171, %v1172
      %v1174 = vand.u32 %v1173, 4294901760
      %1175 = vmatprep.subr.mxu0 %v1174
      %v1176 = vand.u32 %v236, 4294901760
      %v1177 = vsub.f32 %v236, %v1176
      %v1178 = vand.u32 %v1177, 4294901760
      %v1179 = vsub.f32 %v1177, %v1178
      %v1180 = vand.u32 %v1179, 4294901760
      %1181 = vmatpush1.msra.mxu0 %v1180
      %v1182 = vand.u32 %v241, 4294901760
      %v1183 = vsub.f32 %v241, %v1182
      %v1184 = vand.u32 %v1183, 4294901760
      %v1185 = vsub.f32 %v1183, %v1184
      %v1186 = vand.u32 %v1185, 4294901760
      %1187 = vmatprep.subr.mxu0 %v1186
      %v1188 = vand.u32 %v240, 4294901760
      %v1189 = vsub.f32 %v240, %v1188
      %v1190 = vand.u32 %v1189, 4294901760
      %v1191 = vsub.f32 %v1189, %v1190
      %v1192 = vand.u32 %v1191, 4294901760
      %1193 = vmatpush1.msra.mxu0 %v1192
      %1194 = vmatprep.subr.mxu0 0.0
      %1195 = vmatpush1.msra.mxu0 0.0
      %1196 = vmatprep.subr.mxu0 0.0
      %1197 = vmatpush1.msra.mxu0 0.0
      %1198 = vmatprep.subr.mxu0 0.0
      %1199 = vmatpush1.msra.mxu0 0.0
      %1200 = vmatprep.subr.mxu0 0.0
      %1201 = vmatpush1.msra.mxu0 0.0
      %1202 = vmatprep.subr.mxu0 0.0
      %1203 = vmatpush1.msra.mxu0 0.0
      %1204 = vmatprep.subr.mxu0 0.0
      %1205 = vmatpush1.msra.mxu0 0.0
      %1206 = vmatprep.subr.mxu0 0.0
      %1207 = vmatpush1.msra.mxu0 0.0
      %1208 = vmatprep.subr.mxu0 0.0
      %1209 = vmatpush1.msra.mxu0 0.0
      %1210 = vmatprep.subr.mxu0 0.0
      %1211 = vmatpush1.msra.mxu0 0.0
      %1212 = vmatprep.subr.mxu0 0.0
      %1213 = vmatpush1.msra.mxu0 0.0
      %1214 = vmatprep.subr.mxu0 0.0
      %1215 = vmatpush1.msra.mxu0 0.0
      %1216 = vmatprep.subr.mxu0 0.0
      %1217 = vmatpush1.msra.mxu0 0.0
      %1218 = vmatprep.subr.mxu0 0.0
      %1219 = vmatpush1.msra.mxu0 0.0
      %1220 = vmatprep.subr.mxu0 0.0
      %1221 = vmatpush1.msra.mxu0 0.0
      %1222 = vmatprep.subr.mxu0 0.0
      %1223 = vmatpush1.msra.mxu0 0.0
      %1224 = vmatprep.subr.mxu0 0.0
      %1225 = vmatpush1.msra.mxu0 0.0
      %1226 = vmatprep.subr.mxu0 0.0
      %1227 = vmatpush1.msra.mxu0 0.0
      %1228 = vmatprep.subr.mxu0 0.0
      %1229 = vmatpush1.msra.mxu0 0.0
      %1230 = vmatprep.subr.mxu0 0.0
      %1231 = vmatpush1.msra.mxu0 0.0
      %1232 = vmatprep.subr.mxu0 0.0
      %1233 = vmatpush1.msra.mxu0 0.0
      %1234 = vmatprep.subr.mxu0 0.0
      %1235 = vmatpush1.msra.mxu0 0.0
      %1236 = vmatprep.subr.mxu0 0.0
      %1237 = vmatpush1.msra.mxu0 0.0
      %1238 = vmatprep.subr.mxu0 0.0
      %1239 = vmatpush1.msra.mxu0 0.0
      %1240 = vmatprep.subr.mxu0 0.0
      %1241 = vmatpush1.msra.mxu0 0.0
      %1242 = vmatprep.subr.mxu0 0.0
      %1243 = vmatpush1.msra.mxu0 0.0
      %1244 = vmatprep.subr.mxu0 0.0
      %1245 = vmatpush1.msra.mxu0 0.0
      %1246 = vmatprep.mubr.f32.mxu0 0.0
      %v1247 = vand.u32 %v248, 4294901760
      %1248 = vmatmul.mubr.f32.gmra.mrb[0].mxu0 %v1247
      %v1249 = vpop.f32.mrb[0].mxu0
      %v1250 = vadd.f32 %v1085, %v1249
      %v1251 = vpop.f32.mrb[0].mxu0
      %v1252 = vadd.f32 %v1087, %v1251
      %1253 = vmatprep.mubr.f32.mxu0 0.0
      %v1254 = vand.u32 %v251, 4294901760
      %1255 = vmatmul.mubr.f32.gmra.mrb[0].mxu0 %v1254
      %v1256 = vpop.f32.mrb[0].mxu0
      %v1257 = vadd.f32 %v1096, %v1256
      %v1258 = vpop.f32.mrb[0].mxu0
      %v1259 = vadd.f32 %v1098, %v1258
      %1260 = vmatprep.mubr.f32.mxu0 0.0
      %v1261 = vand.u32 %v254, 4294901760
      %1262 = vmatmul.mubr.f32.gmra.mrb[0].mxu0 %v1261
      %v1263 = vpop.f32.mrb[0].mxu0
      %v1264 = vadd.f32 %v1107, %v1263
      %v1265 = vpop.f32.mrb[0].mxu0
      %v1266 = vadd.f32 %v1109, %v1265
      %1267 = vmatprep.mubr.f32.mxu0 0.0
      %v1268 = vand.u32 %v257, 4294901760
      %1269 = vmatmul.mubr.f32.gmra.mrb[0].mxu0 %v1268
      %v1270 = vpop.f32.mrb[0].mxu0
      %v1271 = vadd.f32 %v1118, %v1270
      %v1272 = vpop.f32.mrb[0].mxu0
      %v1273 = vadd.f32 %v1120, %v1272
      %1274 = vdwg.mxu0
      %v1275 = vand.u32 %v221, 4294901760
      %v1276 = vsub.f32 %v221, %v1275
      %1277 = vmatprep.subr.mxu0 %v1276
      %v1278 = vand.u32 %v220, 4294901760
      %v1279 = vsub.f32 %v220, %v1278
      %1280 = vmatpush1.msra.mxu0 %v1279
      %v1281 = vand.u32 %v225, 4294901760
      %v1282 = vsub.f32 %v225, %v1281
      %1283 = vmatprep.subr.mxu0 %v1282
      %v1284 = vand.u32 %v224, 4294901760
      %v1285 = vsub.f32 %v224, %v1284
      %1286 = vmatpush1.msra.mxu0 %v1285
      %v1287 = vand.u32 %v229, 4294901760
      %v1288 = vsub.f32 %v229, %v1287
      %1289 = vmatprep.subr.mxu0 %v1288
      %v1290 = vand.u32 %v228, 4294901760
      %v1291 = vsub.f32 %v228, %v1290
      %1292 = vmatpush1.msra.mxu0 %v1291
      %v1293 = vand.u32 %v233, 4294901760
      %v1294 = vsub.f32 %v233, %v1293
      %1295 = vmatprep.subr.mxu0 %v1294
      %v1296 = vand.u32 %v232, 4294901760
      %v1297 = vsub.f32 %v232, %v1296
      %1298 = vmatpush1.msra.mxu0 %v1297
      %v1299 = vand.u32 %v237, 4294901760
      %v1300 = vsub.f32 %v237, %v1299
      %1301 = vmatprep.subr.mxu0 %v1300
      %v1302 = vand.u32 %v236, 4294901760
      %v1303 = vsub.f32 %v236, %v1302
      %1304 = vmatpush1.msra.mxu0 %v1303
      %v1305 = vand.u32 %v241, 4294901760
      %v1306 = vsub.f32 %v241, %v1305
      %1307 = vmatprep.subr.mxu0 %v1306
      %v1308 = vand.u32 %v240, 4294901760
      %v1309 = vsub.f32 %v240, %v1308
      %1310 = vmatpush1.msra.mxu0 %v1309
      %1311 = vmatprep.subr.mxu0 0.0
      %1312 = vmatpush1.msra.mxu0 0.0
      %1313 = vmatprep.subr.mxu0 0.0
      %1314 = vmatpush1.msra.mxu0 0.0
      %1315 = vmatprep.subr.mxu0 0.0
      %1316 = vmatpush1.msra.mxu0 0.0
      %1317 = vmatprep.subr.mxu0 0.0
      %1318 = vmatpush1.msra.mxu0 0.0
      %1319 = vmatprep.subr.mxu0 0.0
      %1320 = vmatpush1.msra.mxu0 0.0
      %1321 = vmatprep.subr.mxu0 0.0
      %1322 = vmatpush1.msra.mxu0 0.0
      %1323 = vmatprep.subr.mxu0 0.0
      %1324 = vmatpush1.msra.mxu0 0.0
      %1325 = vmatprep.subr.mxu0 0.0
      %1326 = vmatpush1.msra.mxu0 0.0
      %1327 = vmatprep.subr.mxu0 0.0
      %1328 = vmatpush1.msra.mxu0 0.0
      %1329 = vmatprep.subr.mxu0 0.0
      %1330 = vmatpush1.msra.mxu0 0.0
      %1331 = vmatprep.subr.mxu0 0.0
      %1332 = vmatpush1.msra.mxu0 0.0
      %1333 = vmatprep.subr.mxu0 0.0
      %1334 = vmatpush1.msra.mxu0 0.0
      %1335 = vmatprep.subr.mxu0 0.0
      %1336 = vmatpush1.msra.mxu0 0.0
      %1337 = vmatprep.subr.mxu0 0.0
      %1338 = vmatpush1.msra.mxu0 0.0
      %1339 = vmatprep.subr.mxu0 0.0
      %1340 = vmatpush1.msra.mxu0 0.0
      %1341 = vmatprep.subr.mxu0 0.0
      %1342 = vmatpush1.msra.mxu0 0.0
      %1343 = vmatprep.subr.mxu0 0.0
      %1344 = vmatpush1.msra.mxu0 0.0
      %1345 = vmatprep.subr.mxu0 0.0
      %1346 = vmatpush1.msra.mxu0 0.0
      %1347 = vmatprep.subr.mxu0 0.0
      %1348 = vmatpush1.msra.mxu0 0.0
      %1349 = vmatprep.subr.mxu0 0.0
      %1350 = vmatpush1.msra.mxu0 0.0
      %1351 = vmatprep.subr.mxu0 0.0
      %1352 = vmatpush1.msra.mxu0 0.0
      %1353 = vmatprep.subr.mxu0 0.0
      %1354 = vmatpush1.msra.mxu0 0.0
      %1355 = vmatprep.subr.mxu0 0.0
      %1356 = vmatpush1.msra.mxu0 0.0
      %1357 = vmatprep.subr.mxu0 0.0
      %1358 = vmatpush1.msra.mxu0 0.0
      %1359 = vmatprep.subr.mxu0 0.0
      %1360 = vmatpush1.msra.mxu0 0.0
      %1361 = vmatprep.subr.mxu0 0.0
      %1362 = vmatpush1.msra.mxu0 0.0
      %1363 = vmatprep.mubr.f32.mxu0 0.0
      %v1364 = vand.u32 %v248, 4294901760
      %v1365 = vsub.f32 %v248, %v1364
      %1366 = vmatmul.mubr.f32.gmra.mrb[0].mxu0 %v1365
      %v1367 = vpop.f32.mrb[0].mxu0
      %v1368 = vadd.f32 %v1250, %v1367
      %v1369 = vpop.f32.mrb[0].mxu0
      %v1370 = vadd.f32 %v1252, %v1369
      %1371 = vmatprep.mubr.f32.mxu0 0.0
      %v1372 = vand.u32 %v251, 4294901760
      %v1373 = vsub.f32 %v251, %v1372
      %1374 = vmatmul.mubr.f32.gmra.mrb[0].mxu0 %v1373
      %v1375 = vpop.f32.mrb[0].mxu0
      %v1376 = vadd.f32 %v1257, %v1375
      %v1377 = vpop.f32.mrb[0].mxu0
      %v1378 = vadd.f32 %v1259, %v1377
      %1379 = vmatprep.mubr.f32.mxu0 0.0
      %v1380 = vand.u32 %v254, 4294901760
      %v1381 = vsub.f32 %v254, %v1380
      %1382 = vmatmul.mubr.f32.gmra.mrb[0].mxu0 %v1381
      %v1383 = vpop.f32.mrb[0].mxu0
      %v1384 = vadd.f32 %v1264, %v1383
      %v1385 = vpop.f32.mrb[0].mxu0
      %v1386 = vadd.f32 %v1266, %v1385
      %1387 = vmatprep.mubr.f32.mxu0 0.0
      %v1388 = vand.u32 %v257, 4294901760
      %v1389 = vsub.f32 %v257, %v1388
      %1390 = vmatmul.mubr.f32.gmra.mrb[0].mxu0 %v1389
      %v1391 = vpop.f32.mrb[0].mxu0
      %v1392 = vadd.f32 %v1271, %v1391
      %v1393 = vpop.f32.mrb[0].mxu0
      %v1394 = vadd.f32 %v1273, %v1393
      %1395 = vdwg.mxu0
      %v1396 = vand.u32 %v221, 4294901760
      %1397 = vmatprep.subr.mxu0 %v1396
      %v1398 = vand.u32 %v220, 4294901760
      %1399 = vmatpush1.msra.mxu0 %v1398
      %v1400 = vand.u32 %v225, 4294901760
      %1401 = vmatprep.subr.mxu0 %v1400
      %v1402 = vand.u32 %v224, 4294901760
      %1403 = vmatpush1.msra.mxu0 %v1402
      %v1404 = vand.u32 %v229, 4294901760
      %1405 = vmatprep.subr.mxu0 %v1404
      %v1406 = vand.u32 %v228, 4294901760
      %1407 = vmatpush1.msra.mxu0 %v1406
      %v1408 = vand.u32 %v233, 4294901760
      %1409 = vmatprep.subr.mxu0 %v1408
      %v1410 = vand.u32 %v232, 4294901760
      %1411 = vmatpush1.msra.mxu0 %v1410
      %v1412 = vand.u32 %v237, 4294901760
      %1413 = vmatprep.subr.mxu0 %v1412
      %v1414 = vand.u32 %v236, 4294901760
      %1415 = vmatpush1.msra.mxu0 %v1414
      %v1416 = vand.u32 %v241, 4294901760
      %1417 = vmatprep.subr.mxu0 %v1416
      %v1418 = vand.u32 %v240, 4294901760
      %1419 = vmatpush1.msra.mxu0 %v1418
      %1420 = vmatprep.subr.mxu0 0.0
      %1421 = vmatpush1.msra.mxu0 0.0
      %1422 = vmatprep.subr.mxu0 0.0
      %1423 = vmatpush1.msra.mxu0 0.0
      %1424 = vmatprep.subr.mxu0 0.0
      %1425 = vmatpush1.msra.mxu0 0.0
      %1426 = vmatprep.subr.mxu0 0.0
      %1427 = vmatpush1.msra.mxu0 0.0
      %1428 = vmatprep.subr.mxu0 0.0
      %1429 = vmatpush1.msra.mxu0 0.0
      %1430 = vmatprep.subr.mxu0 0.0
      %1431 = vmatpush1.msra.mxu0 0.0
      %1432 = vmatprep.subr.mxu0 0.0
      %1433 = vmatpush1.msra.mxu0 0.0
      %1434 = vmatprep.subr.mxu0 0.0
      %1435 = vmatpush1.msra.mxu0 0.0
      %1436 = vmatprep.subr.mxu0 0.0
      %1437 = vmatpush1.msra.mxu0 0.0
      %1438 = vmatprep.subr.mxu0 0.0
      %1439 = vmatpush1.msra.mxu0 0.0
      %1440 = vmatprep.subr.mxu0 0.0
      %1441 = vmatpush1.msra.mxu0 0.0
      %1442 = vmatprep.subr.mxu0 0.0
      %1443 = vmatpush1.msra.mxu0 0.0
      %1444 = vmatprep.subr.mxu0 0.0
      %1445 = vmatpush1.msra.mxu0 0.0
      %1446 = vmatprep.subr.mxu0 0.0
      %1447 = vmatpush1.msra.mxu0 0.0
      %1448 = vmatprep.subr.mxu0 0.0
      %1449 = vmatpush1.msra.mxu0 0.0
      %1450 = vmatprep.subr.mxu0 0.0
      %1451 = vmatpush1.msra.mxu0 0.0
      %1452 = vmatprep.subr.mxu0 0.0
      %1453 = vmatpush1.msra.mxu0 0.0
      %1454 = vmatprep.subr.mxu0 0.0
      %1455 = vmatpush1.msra.mxu0 0.0
      %1456 = vmatprep.subr.mxu0 0.0
      %1457 = vmatpush1.msra.mxu0 0.0
      %1458 = vmatprep.subr.mxu0 0.0
      %1459 = vmatpush1.msra.mxu0 0.0
      %1460 = vmatprep.subr.mxu0 0.0
      %1461 = vmatpush1.msra.mxu0 0.0
      %1462 = vmatprep.subr.mxu0 0.0
      %1463 = vmatpush1.msra.mxu0 0.0
      %1464 = vmatprep.subr.mxu0 0.0
      %1465 = vmatpush1.msra.mxu0 0.0
      %1466 = vmatprep.subr.mxu0 0.0
      %1467 = vmatpush1.msra.mxu0 0.0
      %1468 = vmatprep.subr.mxu0 0.0
      %1469 = vmatpush1.msra.mxu0 0.0
      %1470 = vmatprep.subr.mxu0 0.0
      %1471 = vmatpush1.msra.mxu0 0.0
      %1472 = vmatprep.mubr.f32.mxu0 0.0
      %v1473 = vand.u32 %v248, 4294901760
      %v1474 = vsub.f32 %v248, %v1473
      %v1475 = vand.u32 %v1474, 4294901760
      %1476 = vmatmul.mubr.f32.gmra.mrb[0].mxu0 %v1475
      %v1477 = vpop.f32.mrb[0].mxu0
      %v1478 = vadd.f32 %v1368, %v1477
      %v1479 = vpop.f32.mrb[0].mxu0
      %v1480 = vadd.f32 %v1370, %v1479
      %1481 = vmatprep.mubr.f32.mxu0 0.0
      %v1482 = vand.u32 %v251, 4294901760
      %v1483 = vsub.f32 %v251, %v1482
      %v1484 = vand.u32 %v1483, 4294901760
      %1485 = vmatmul.mubr.f32.gmra.mrb[0].mxu0 %v1484
      %v1486 = vpop.f32.mrb[0].mxu0
      %v1487 = vadd.f32 %v1376, %v1486
      %v1488 = vpop.f32.mrb[0].mxu0
      %v1489 = vadd.f32 %v1378, %v1488
      %1490 = vmatprep.mubr.f32.mxu0 0.0
      %v1491 = vand.u32 %v254, 4294901760
      %v1492 = vsub.f32 %v254, %v1491
      %v1493 = vand.u32 %v1492, 4294901760
      %1494 = vmatmul.mubr.f32.gmra.mrb[0].mxu0 %v1493
      %v1495 = vpop.f32.mrb[0].mxu0
      %v1496 = vadd.f32 %v1384, %v1495
      %v1497 = vpop.f32.mrb[0].mxu0
      %v1498 = vadd.f32 %v1386, %v1497
      %1499 = vmatprep.mubr.f32.mxu0 0.0
      %v1500 = vand.u32 %v257, 4294901760
      %v1501 = vsub.f32 %v257, %v1500
      %v1502 = vand.u32 %v1501, 4294901760
      %1503 = vmatmul.mubr.f32.gmra.mrb[0].mxu0 %v1502
      %v1504 = vpop.f32.mrb[0].mxu0
      %v1505 = vadd.f32 %v1392, %v1504
      %v1506 = vpop.f32.mrb[0].mxu0
      %v1507 = vadd.f32 %v1394, %v1506
      %1508 = vdwg.mxu0
      %v1509 = vand.u32 %v221, 4294901760
      %v1510 = vsub.f32 %v221, %v1509
      %v1511 = vand.u32 %v1510, 4294901760
      %1512 = vmatprep.subr.mxu0 %v1511
      %v1513 = vand.u32 %v220, 4294901760
      %v1514 = vsub.f32 %v220, %v1513
      %v1515 = vand.u32 %v1514, 4294901760
      %1516 = vmatpush1.msra.mxu0 %v1515
      %v1517 = vand.u32 %v225, 4294901760
      %v1518 = vsub.f32 %v225, %v1517
      %v1519 = vand.u32 %v1518, 4294901760
      %1520 = vmatprep.subr.mxu0 %v1519
      %v1521 = vand.u32 %v224, 4294901760
      %v1522 = vsub.f32 %v224, %v1521
      %v1523 = vand.u32 %v1522, 4294901760
      %1524 = vmatpush1.msra.mxu0 %v1523
      %v1525 = vand.u32 %v229, 4294901760
      %v1526 = vsub.f32 %v229, %v1525
      %v1527 = vand.u32 %v1526, 4294901760
      %1528 = vmatprep.subr.mxu0 %v1527
      %v1529 = vand.u32 %v228, 4294901760
      %v1530 = vsub.f32 %v228, %v1529
      %v1531 = vand.u32 %v1530, 4294901760
      %1532 = vmatpush1.msra.mxu0 %v1531
      %v1533 = vand.u32 %v233, 4294901760
      %v1534 = vsub.f32 %v233, %v1533
      %v1535 = vand.u32 %v1534, 4294901760
      %1536 = vmatprep.subr.mxu0 %v1535
      %v1537 = vand.u32 %v232, 4294901760
      %v1538 = vsub.f32 %v232, %v1537
      %v1539 = vand.u32 %v1538, 4294901760
      %1540 = vmatpush1.msra.mxu0 %v1539
      %v1541 = vand.u32 %v237, 4294901760
      %v1542 = vsub.f32 %v237, %v1541
      %v1543 = vand.u32 %v1542, 4294901760
      %1544 = vmatprep.subr.mxu0 %v1543
      %v1545 = vand.u32 %v236, 4294901760
      %v1546 = vsub.f32 %v236, %v1545
      %v1547 = vand.u32 %v1546, 4294901760
      %1548 = vmatpush1.msra.mxu0 %v1547
      %v1549 = vand.u32 %v241, 4294901760
      %v1550 = vsub.f32 %v241, %v1549
      %v1551 = vand.u32 %v1550, 4294901760
      %1552 = vmatprep.subr.mxu0 %v1551
      %v1553 = vand.u32 %v240, 4294901760
      %v1554 = vsub.f32 %v240, %v1553
      %v1555 = vand.u32 %v1554, 4294901760
      %1556 = vmatpush1.msra.mxu0 %v1555
      %1557 = vmatprep.subr.mxu0 0.0
      %1558 = vmatpush1.msra.mxu0 0.0
      %1559 = vmatprep.subr.mxu0 0.0
      %1560 = vmatpush1.msra.mxu0 0.0
      %1561 = vmatprep.subr.mxu0 0.0
      %1562 = vmatpush1.msra.mxu0 0.0
      %1563 = vmatprep.subr.mxu0 0.0
      %1564 = vmatpush1.msra.mxu0 0.0
      %1565 = vmatprep.subr.mxu0 0.0
      %1566 = vmatpush1.msra.mxu0 0.0
      %1567 = vmatprep.subr.mxu0 0.0
      %1568 = vmatpush1.msra.mxu0 0.0
      %1569 = vmatprep.subr.mxu0 0.0
      %1570 = vmatpush1.msra.mxu0 0.0
      %1571 = vmatprep.subr.mxu0 0.0
      %1572 = vmatpush1.msra.mxu0 0.0
      %1573 = vmatprep.subr.mxu0 0.0
      %1574 = vmatpush1.msra.mxu0 0.0
      %1575 = vmatprep.subr.mxu0 0.0
      %1576 = vmatpush1.msra.mxu0 0.0
      %1577 = vmatprep.subr.mxu0 0.0
      %1578 = vmatpush1.msra.mxu0 0.0
      %1579 = vmatprep.subr.mxu0 0.0
      %1580 = vmatpush1.msra.mxu0 0.0
      %1581 = vmatprep.subr.mxu0 0.0
      %1582 = vmatpush1.msra.mxu0 0.0
      %1583 = vmatprep.subr.mxu0 0.0
      %1584 = vmatpush1.msra.mxu0 0.0
      %1585 = vmatprep.subr.mxu0 0.0
      %1586 = vmatpush1.msra.mxu0 0.0
      %1587 = vmatprep.subr.mxu0 0.0
      %1588 = vmatpush1.msra.mxu0 0.0
      %1589 = vmatprep.subr.mxu0 0.0
      %1590 = vmatpush1.msra.mxu0 0.0
      %1591 = vmatprep.subr.mxu0 0.0
      %1592 = vmatpush1.msra.mxu0 0.0
      %1593 = vmatprep.subr.mxu0 0.0
      %1594 = vmatpush1.msra.mxu0 0.0
      %1595 = vmatprep.subr.mxu0 0.0
      %1596 = vmatpush1.msra.mxu0 0.0
      %1597 = vmatprep.subr.mxu0 0.0
      %1598 = vmatpush1.msra.mxu0 0.0
      %1599 = vmatprep.subr.mxu0 0.0
      %1600 = vmatpush1.msra.mxu0 0.0
      %1601 = vmatprep.subr.mxu0 0.0
      %1602 = vmatpush1.msra.mxu0 0.0
      %1603 = vmatprep.subr.mxu0 0.0
      %1604 = vmatpush1.msra.mxu0 0.0
      %1605 = vmatprep.subr.mxu0 0.0
      %1606 = vmatpush1.msra.mxu0 0.0
      %1607 = vmatprep.subr.mxu0 0.0
      %1608 = vmatpush1.msra.mxu0 0.0
      %1609 = vmatprep.mubr.f32.mxu0 0.0
      %v1610 = vand.u32 %v248, 4294901760
      %1611 = vmatmul.mubr.f32.gmra.mrb[0].mxu0 %v1610
      %v1612 = vpop.f32.mrb[0].mxu0
      %v1613 = vadd.f32 %v1478, %v1612
      %v1614 = vpop.f32.mrb[0].mxu0
      %v1615 = vadd.f32 %v1480, %v1614
      %1616 = vmatprep.mubr.f32.mxu0 0.0
      %v1617 = vand.u32 %v251, 4294901760
      %1618 = vmatmul.mubr.f32.gmra.mrb[0].mxu0 %v1617
      %v1619 = vpop.f32.mrb[0].mxu0
      %v1620 = vadd.f32 %v1487, %v1619
      %v1621 = vpop.f32.mrb[0].mxu0
      %v1622 = vadd.f32 %v1489, %v1621
      %1623 = vmatprep.mubr.f32.mxu0 0.0
      %v1624 = vand.u32 %v254, 4294901760
      %1625 = vmatmul.mubr.f32.gmra.mrb[0].mxu0 %v1624
      %v1626 = vpop.f32.mrb[0].mxu0
      %v1627 = vadd.f32 %v1496, %v1626
      %v1628 = vpop.f32.mrb[0].mxu0
      %v1629 = vadd.f32 %v1498, %v1628
      %1630 = vmatprep.mubr.f32.mxu0 0.0
      %v1631 = vand.u32 %v257, 4294901760
      %1632 = vmatmul.mubr.f32.gmra.mrb[0].mxu0 %v1631
      %v1633 = vpop.f32.mrb[0].mxu0
      %v1634 = vadd.f32 %v1505, %v1633
      %v1635 = vpop.f32.mrb[0].mxu0
      %v1636 = vadd.f32 %v1507, %v1635
      %1637 = vdwg.mxu0
      %v1638 = vand.u32 %v221, 4294901760
      %1639 = vmatprep.subr.mxu0 %v1638
      %v1640 = vand.u32 %v220, 4294901760
      %1641 = vmatpush1.msra.mxu0 %v1640
      %v1642 = vand.u32 %v225, 4294901760
      %1643 = vmatprep.subr.mxu0 %v1642
      %v1644 = vand.u32 %v224, 4294901760
      %1645 = vmatpush1.msra.mxu0 %v1644
      %v1646 = vand.u32 %v229, 4294901760
      %1647 = vmatprep.subr.mxu0 %v1646
      %v1648 = vand.u32 %v228, 4294901760
      %1649 = vmatpush1.msra.mxu0 %v1648
      %v1650 = vand.u32 %v233, 4294901760
      %1651 = vmatprep.subr.mxu0 %v1650
      %v1652 = vand.u32 %v232, 4294901760
      %1653 = vmatpush1.msra.mxu0 %v1652
      %v1654 = vand.u32 %v237, 4294901760
      %1655 = vmatprep.subr.mxu0 %v1654
      %v1656 = vand.u32 %v236, 4294901760
      %1657 = vmatpush1.msra.mxu0 %v1656
      %v1658 = vand.u32 %v241, 4294901760
      %1659 = vmatprep.subr.mxu0 %v1658
      %v1660 = vand.u32 %v240, 4294901760
      %1661 = vmatpush1.msra.mxu0 %v1660
      %1662 = vmatprep.subr.mxu0 0.0
      %1663 = vmatpush1.msra.mxu0 0.0
      %1664 = vmatprep.subr.mxu0 0.0
      %1665 = vmatpush1.msra.mxu0 0.0
      %1666 = vmatprep.subr.mxu0 0.0
      %1667 = vmatpush1.msra.mxu0 0.0
      %1668 = vmatprep.subr.mxu0 0.0
      %1669 = vmatpush1.msra.mxu0 0.0
      %1670 = vmatprep.subr.mxu0 0.0
      %1671 = vmatpush1.msra.mxu0 0.0
      %1672 = vmatprep.subr.mxu0 0.0
      %1673 = vmatpush1.msra.mxu0 0.0
      %1674 = vmatprep.subr.mxu0 0.0
      %1675 = vmatpush1.msra.mxu0 0.0
      %1676 = vmatprep.subr.mxu0 0.0
      %1677 = vmatpush1.msra.mxu0 0.0
      %1678 = vmatprep.subr.mxu0 0.0
      %1679 = vmatpush1.msra.mxu0 0.0
      %1680 = vmatprep.subr.mxu0 0.0
      %1681 = vmatpush1.msra.mxu0 0.0
      %1682 = vmatprep.subr.mxu0 0.0
      %1683 = vmatpush1.msra.mxu0 0.0
      %1684 = vmatprep.subr.mxu0 0.0
      %1685 = vmatpush1.msra.mxu0 0.0
      %1686 = vmatprep.subr.mxu0 0.0
      %1687 = vmatpush1.msra.mxu0 0.0
      %1688 = vmatprep.subr.mxu0 0.0
      %1689 = vmatpush1.msra.mxu0 0.0
      %1690 = vmatprep.subr.mxu0 0.0
      %1691 = vmatpush1.msra.mxu0 0.0
      %1692 = vmatprep.subr.mxu0 0.0
      %1693 = vmatpush1.msra.mxu0 0.0
      %1694 = vmatprep.subr.mxu0 0.0
      %1695 = vmatpush1.msra.mxu0 0.0
      %1696 = vmatprep.subr.mxu0 0.0
      %1697 = vmatpush1.msra.mxu0 0.0
      %1698 = vmatprep.subr.mxu0 0.0
      %1699 = vmatpush1.msra.mxu0 0.0
      %1700 = vmatprep.subr.mxu0 0.0
      %1701 = vmatpush1.msra.mxu0 0.0
      %1702 = vmatprep.subr.mxu0 0.0
      %1703 = vmatpush1.msra.mxu0 0.0
      %1704 = vmatprep.subr.mxu0 0.0
      %1705 = vmatpush1.msra.mxu0 0.0
      %1706 = vmatprep.subr.mxu0 0.0
      %1707 = vmatpush1.msra.mxu0 0.0
      %1708 = vmatprep.subr.mxu0 0.0
      %1709 = vmatpush1.msra.mxu0 0.0
      %1710 = vmatprep.subr.mxu0 0.0
      %1711 = vmatpush1.msra.mxu0 0.0
      %1712 = vmatprep.subr.mxu0 0.0
      %1713 = vmatpush1.msra.mxu0 0.0
      %1714 = vmatprep.mubr.f32.mxu0 0.0
      %v1715 = vand.u32 %v248, 4294901760
      %1716 = vmatmul.mubr.f32.gmra.mrb[0].mxu0 %v1715
      %v1717 = vpop.f32.mrb[0].mxu0
      %v1718 = vadd.f32 %v1613, %v1717
      %v1719 = vpop.f32.mrb[0].mxu0
      %v1720 = vadd.f32 %v1615, %v1719
      %1721 = vmatprep.mubr.f32.mxu0 0.0
      %v1722 = vand.u32 %v251, 4294901760
      %1723 = vmatmul.mubr.f32.gmra.mrb[0].mxu0 %v1722
      %v1724 = vpop.f32.mrb[0].mxu0
      %v1725 = vadd.f32 %v1620, %v1724
      %v1726 = vpop.f32.mrb[0].mxu0
      %v1727 = vadd.f32 %v1622, %v1726
      %1728 = vmatprep.mubr.f32.mxu0 0.0
      %v1729 = vand.u32 %v254, 4294901760
      %1730 = vmatmul.mubr.f32.gmra.mrb[0].mxu0 %v1729
      %v1731 = vpop.f32.mrb[0].mxu0
      %v1732 = vadd.f32 %v1627, %v1731
      %v1733 = vpop.f32.mrb[0].mxu0
      %v1734 = vadd.f32 %v1629, %v1733
      %1735 = vmatprep.mubr.f32.mxu0 0.0
      %v1736 = vand.u32 %v257, 4294901760
      %1737 = vmatmul.mubr.f32.gmra.mrb[0].mxu0 %v1736
      %v1738 = vpop.f32.mrb[0].mxu0
      %v1739 = vadd.f32 %v1634, %v1738
      %v1740 = vpop.f32.mrb[0].mxu0
      %v1741 = vadd.f32 %v1636, %v1740
      %1742 = vdwg.mxu0
      %v1743 = vadd.f32 %v976, %v978
      %v1744 = vadd.f32 %v1743, %v1718
      %v1745 = vadd.f32 %v1744, %v1720
      %1746 = vadd.xlane.f32.xlu0 %v1745
      %v1747 = vpop.xlane.xlu0 %1746
      %v1748 = vadd.f32 %v983, %v985
      %v1749 = vadd.f32 %v1748, %v1725
      %v1750 = vadd.f32 %v1749, %v1727
      %1751 = vadd.xlane.f32.xlu0 %v1750
      %v1752 = vpop.xlane.xlu0 %1751
      %v1753 = vadd.f32 %v990, %v992
      %v1754 = vadd.f32 %v1753, %v1732
      %v1755 = vadd.f32 %v1754, %v1734
      %1756 = vadd.xlane.f32.xlu0 %v1755
      %v1757 = vpop.xlane.xlu0 %1756
      %v1758 = vadd.f32 %v997, %v999
      %v1759 = vadd.f32 %v1758, %v1739
      %v1760 = vadd.f32 %v1759, %v1741
      %1761 = vadd.xlane.f32.xlu0 %v1760
      %v1762 = vpop.xlane.xlu0 %1761
      %v1763 = vrcp.pop 512.0
      %v1764 = vmul.f32 %v1747, %v1763
      %v1765 = vmul.f32 %v1752, %v1763
      %v1766 = vmul.f32 %v1757, %v1763
      %v1767 = vmul.f32 %v1762, %v1763
      %v1768 = vsub.f32 %v976, %v1764
      %v1769 = vsub.f32 %v978, %v1764
      %v1770 = vsub.f32 %v1718, %v1764
      %v1771 = vsub.f32 %v1720, %v1764
      %v1772 = vsub.f32 %v983, %v1765
      %v1773 = vsub.f32 %v985, %v1765
      %v1774 = vsub.f32 %v1725, %v1765
      %v1775 = vsub.f32 %v1727, %v1765
      %v1776 = vsub.f32 %v990, %v1766
      %v1777 = vsub.f32 %v992, %v1766
      %v1778 = vsub.f32 %v1732, %v1766
      %v1779 = vsub.f32 %v1734, %v1766
      %v1780 = vsub.f32 %v997, %v1767
      %v1781 = vsub.f32 %v999, %v1767
      %v1782 = vsub.f32 %v1739, %v1767
      %v1783 = vsub.f32 %v1741, %v1767
      %v1784 = vmul.f32 %v1768, %v1768
      %v1785 = vmul.f32 %v1769, %v1769
      %v1786 = vmul.f32 %v1770, %v1770
      %v1787 = vmul.f32 %v1771, %v1771
      %v1788 = vmul.f32 %v1772, %v1772
      %v1789 = vmul.f32 %v1773, %v1773
      %v1790 = vmul.f32 %v1774, %v1774
      %v1791 = vmul.f32 %v1775, %v1775
      %v1792 = vmul.f32 %v1776, %v1776
      %v1793 = vmul.f32 %v1777, %v1777
      %v1794 = vmul.f32 %v1778, %v1778
      %v1795 = vmul.f32 %v1779, %v1779
      %v1796 = vmul.f32 %v1780, %v1780
      %v1797 = vmul.f32 %v1781, %v1781
      %v1798 = vmul.f32 %v1782, %v1782
      %v1799 = vmul.f32 %v1783, %v1783
      %v1800 = vadd.f32 %v1784, %v1785
      %v1801 = vadd.f32 %v1800, %v1786
      %v1802 = vadd.f32 %v1801, %v1787
      %1803 = vadd.xlane.f32.xlu0 %v1802
      %v1804 = vpop.xlane.xlu0 %1803
      %v1805 = vadd.f32 %v1788, %v1789
      %v1806 = vadd.f32 %v1805, %v1790
      %v1807 = vadd.f32 %v1806, %v1791
      %1808 = vadd.xlane.f32.xlu0 %v1807
      %v1809 = vpop.xlane.xlu0 %1808
      %v1810 = vadd.f32 %v1792, %v1793
      %v1811 = vadd.f32 %v1810, %v1794
      %v1812 = vadd.f32 %v1811, %v1795
      %1813 = vadd.xlane.f32.xlu0 %v1812
      %v1814 = vpop.xlane.xlu0 %1813
      %v1815 = vadd.f32 %v1796, %v1797
      %v1816 = vadd.f32 %v1815, %v1798
      %v1817 = vadd.f32 %v1816, %v1799
      %1818 = vadd.xlane.f32.xlu0 %v1817
      %v1819 = vpop.xlane.xlu0 %1818
      %v1820 = vmul.f32 %v1804, %v1763
      %v1821 = vmul.f32 %v1809, %v1763
      %v1822 = vmul.f32 %v1814, %v1763
      %v1823 = vmul.f32 %v1819, %v1763
      %v1824 = vadd.f32 %v1820, 1e-05
      %v1825 = vadd.f32 %v1821, 1e-05
      %v1826 = vadd.f32 %v1822, 1e-05
      %v1827 = vadd.f32 %v1823, 1e-05
      %v1828 = vrsqrt.pop %v1824
      %v1829 = vrsqrt.pop %v1825
      %v1830 = vrsqrt.pop %v1826
      %v1831 = vrsqrt.pop %v1827
      %v1832 = vmul.f32 %v1768, %v1828
      %v1833 = vmul.f32 %v1769, %v1828
      %v1834 = vmul.f32 %v1770, %v1828
      %v1835 = vmul.f32 %v1771, %v1828
      %v1836 = vmul.f32 %v1772, %v1829
      %v1837 = vmul.f32 %v1773, %v1829
      %v1838 = vmul.f32 %v1774, %v1829
      %v1839 = vmul.f32 %v1775, %v1829
      %v1840 = vmul.f32 %v1776, %v1830
      %v1841 = vmul.f32 %v1777, %v1830
      %v1842 = vmul.f32 %v1778, %v1830
      %v1843 = vmul.f32 %v1779, %v1830
      %v1844 = vmul.f32 %v1780, %v1831
      %v1845 = vmul.f32 %v1781, %v1831
      %v1846 = vmul.f32 %v1782, %v1831
      %v1847 = vmul.f32 %v1783, %v1831
      %v1848 = vadd.f32 %v1832, %v1840
      %v1849 = vadd.f32 %v1833, %v1841
      %v1850 = vadd.f32 %v1834, %v1842
      %v1851 = vadd.f32 %v1835, %v1843
      %v1852 = vadd.f32 %v1836, %v1844
      %v1853 = vadd.f32 %v1837, %v1845
      %v1854 = vadd.f32 %v1838, %v1846
      %v1855 = vadd.f32 %v1839, %v1847
      %v1856 = vmax.f32 %v1848, 0.0
      %v1857 = vmax.f32 %v1849, 0.0
      %v1858 = vmax.f32 %v1850, 0.0
      %v1859 = vmax.f32 %v1851, 0.0
      %v1860 = vmax.f32 %v1852, 0.0
      %v1861 = vmax.f32 %v1853, 0.0
      %v1862 = vmax.f32 %v1854, 0.0
      %v1863 = vmax.f32 %v1855, 0.0
      %v1864 = vld [vmem:[%s3] sm:$0xff]
      %v1865 = vld [vmem:[%s3 + $0x8] sm:$0xff]
      %1867 = vset.pattern.permute.xlu0 0
      %1868 = vperm.xlu0 %1867, %v1864
      %v1869 = vpop.permute.xlu0 %1868
      %1872 = vset.pattern.permute.xlu0 0
      %1873 = vperm.xlu0 %1872, %v1865
      %v1874 = vpop.permute.xlu0 %1873
      %v1876 = vmul.f32 %v1856, %v1869
      %v1877 = vmul.f32 %v1857, %v1869
      %v1878 = vmul.f32 %v1858, %v1869
      %v1879 = vmul.f32 %v1859, %v1869
      %v1880 = vmul.f32 %v1860, %v1874
      %v1881 = vmul.f32 %v1861, %v1874
      %v1882 = vmul.f32 %v1862, %v1874
      %v1883 = vmul.f32 %v1863, %v1874
      %v1884 = vadd.f32 %v1876, %v1880
      %v1885 = vrot.slane %v1884, 4
      %v1886 = vadd.f32 %v1884, %v1885
      %v1887 = vrot.slane %v1886, 2
      %v1888 = vadd.f32 %v1886, %v1887
      %v1889 = vrot.slane %v1888, 1
      %v1890 = vadd.f32 %v1888, %v1889
      %v1891 = vadd.f32 %v1877, %v1881
      %v1892 = vrot.slane %v1891, 4
      %v1893 = vadd.f32 %v1891, %v1892
      %v1894 = vrot.slane %v1893, 2
      %v1895 = vadd.f32 %v1893, %v1894
      %v1896 = vrot.slane %v1895, 1
      %v1897 = vadd.f32 %v1895, %v1896
      %v1898 = vadd.f32 %v1878, %v1882
      %v1899 = vrot.slane %v1898, 4
      %v1900 = vadd.f32 %v1898, %v1899
      %v1901 = vrot.slane %v1900, 2
      %v1902 = vadd.f32 %v1900, %v1901
      %v1903 = vrot.slane %v1902, 1
      %v1904 = vadd.f32 %v1902, %v1903
      %v1905 = vadd.f32 %v1879, %v1883
      %v1906 = vrot.slane %v1905, 4
      %v1907 = vadd.f32 %v1905, %v1906
      %v1908 = vrot.slane %v1907, 2
      %v1909 = vadd.f32 %v1907, %v1908
      %v1910 = vrot.slane %v1909, 1
      %v1911 = vadd.f32 %v1909, %v1910
      %v1912 = vadd.f32 %v1890, %v1897
      %v1913 = vadd.f32 %v1912, %v1904
      %v1914 = vadd.f32 %v1913, %v1911
      %1915 = vadd.xlane.f32.xlu0 %v1914
      %v1916 = vpop.xlane.xlu0 %1915
      %v1917 = vmul.f32 %v1916, %v1763
      %v1918 = vsub.f32 %v1890, %v1917
      %v1919 = vsub.f32 %v1897, %v1917
      %v1920 = vsub.f32 %v1904, %v1917
      %v1921 = vsub.f32 %v1911, %v1917
      %v1922 = vmul.f32 %v1918, %v1918
      %v1923 = vmul.f32 %v1919, %v1919
      %v1924 = vmul.f32 %v1920, %v1920
      %v1925 = vmul.f32 %v1921, %v1921
      %v1926 = vadd.f32 %v1922, %v1923
      %v1927 = vadd.f32 %v1926, %v1924
      %v1928 = vadd.f32 %v1927, %v1925
      %1929 = vadd.xlane.f32.xlu0 %v1928
      %v1930 = vpop.xlane.xlu0 %1929
      %v1931 = vmul.f32 %v1930, %v1763
      %v1932 = vadd.f32 %v1931, 1e-05
      %v1933 = vrsqrt.pop %v1932
      %v1934 = vmul.f32 %v1918, %v1933
      %v1935 = vmul.f32 %v1919, %v1933
      %v1936 = vmul.f32 %v1920, %v1933
      %v1937 = vmul.f32 %v1921, %v1933
      %v1938 = vxor.u32 %v1934, 2147483648
      %v1939 = vxor.u32 %v1935, 2147483648
      %v1940 = vxor.u32 %v1936, 2147483648
      %v1941 = vxor.u32 %v1937, 2147483648
      %v1942 = vmul.f32 %v1938, 1.442695
      %v1943 = vpow.pop %v1942
      %v1944 = vmul.f32 %v1939, 1.442695
      %v1945 = vpow.pop %v1944
      %v1946 = vmul.f32 %v1940, 1.442695
      %v1947 = vpow.pop %v1946
      %v1948 = vmul.f32 %v1941, 1.442695
      %v1949 = vpow.pop %v1948
      %v1950 = vadd.f32 %v1943, 1.0
      %v1951 = vadd.f32 %v1945, 1.0
      %v1952 = vadd.f32 %v1947, 1.0
      %v1953 = vadd.f32 %v1949, 1.0
      %v1954 = vrcp.pop %v1950
      %v1955 = vmul.f32 1.0, %v1954
      %v1956 = vrcp.pop %v1951
      %v1957 = vmul.f32 1.0, %v1956
      %v1958 = vrcp.pop %v1952
      %v1959 = vmul.f32 1.0, %v1958
      %v1960 = vrcp.pop %v1953
      %v1961 = vmul.f32 1.0, %v1960
      %v1962 = vmul.f32 %v226, %v1955
      %v1963 = vmul.f32 %v227, %v1957
      %v1964 = vmul.f32 %v228, %v1959
      %v1965 = vmul.f32 %v229, %v1961
      %v1966 = vmul.f32 %v230, %v1955
      %v1967 = vmul.f32 %v231, %v1957
      %v1968 = vmul.f32 %v232, %v1959
      %v1969 = vmul.f32 %v233, %v1961
      %v1970 = vmul.f32 %v234, %v1955
      %v1971 = vmul.f32 %v235, %v1957
      %v1972 = vmul.f32 %v236, %v1959
      %v1973 = vmul.f32 %v237, %v1961
      %v1974 = vmul.f32 %v238, %v1955
      %v1975 = vmul.f32 %v239, %v1957
      %v1976 = vmul.f32 %v240, %v1959
      %v1977 = vmul.f32 %v241, %v1961
      %1978 = vst [vmem:[%s217] sm:$0xff] %v1962
      %1979 = vst [vmem:[%s217 + $0x8] sm:$0xff] %v1963
      %1980 = vst [vmem:[%s217 + $0x10] sm:$0xff] %v1964
      %1981 = vst [vmem:[%s217 + $0x18] sm:$0xff] %v1965
      %1982 = vst [vmem:[%s217 + $0x20] sm:$0xff] %v1966
      %1983 = vst [vmem:[%s217 + $0x28] sm:$0xff] %v1967
      %1984 = vst [vmem:[%s217 + $0x30] sm:$0xff] %v1968
      %1985 = vst [vmem:[%s217 + $0x38] sm:$0xff] %v1969
      %1986 = vst [vmem:[%s217 + $0x40] sm:$0xff] %v1970
      %1987 = vst [vmem:[%s217 + $0x48] sm:$0xff] %v1971
      %1988 = vst [vmem:[%s217 + $0x50] sm:$0xff] %v1972
      %1989 = vst [vmem:[%s217 + $0x58] sm:$0xff] %v1973
      %1990 = vst [vmem:[%s217 + $0x60] sm:$0xff] %v1974
      %1991 = vst [vmem:[%s217 + $0x68] sm:$0xff] %v1975
      %1992 = vst [vmem:[%s217 + $0x70] sm:$0xff] %v1976
      %1993 = vst [vmem:[%s217 + $0x78] sm:$0xff] %v1977
      %p1994 = scmp.lt.s32.totalorder %s15, 1
      %s1995 = scalar_select %p1994, %s15, 1
      %s1996 = smul.addr %s1995, 16
      %s1997 = smul.addr %s1996, 8
      %s1998 = scalar_lea.vmem %s4, %s1997
      // Predicated region
      $region37: #{attention_block.1} parent=35 // pred_check
        %p1999 = pneg %p127
      $region38: #{attention_block.1} parent=35 // pred_check_branch
        %2001 = sbr.rel (%p1999) target = $region40
      $region39: #{attention_block.1} parent=35 // pred_region
        _
      $region40: #{attention_block.1} parent=35 // pred_fallthru
        _
    $region36: #{attention_block.1} parent=5 // pred_fallthru
      _
    %p2002 = scmp.le.s32.totalorder 2, %s10
    // Predicated region
    $region41: #{attention_block.1} parent=5 // pred_check
      %p2003 = pneg %p2002
    $region42: #{attention_block.1} parent=5 // pred_check_branch
      %2005 = sbr.rel (%p2003) target = $region44
    $region43: #{attention_block.1} parent=5 // pred_region
      %s2006 = ssub.s32 %s10, 2
      // Predicated region
      $region45: #{attention_block.1} parent=43 // pred_check
        %p2007 = pneg %p133
      $region46: #{attention_block.1} parent=43 // pred_check_branch
        %2009 = sbr.rel (%p2007) target = $region48
      $region47: #{attention_block.1} parent=43 // pred_region
        %p2010 = scmp.lt.s32.totalorder %s16, 1
        %s2011 = scalar_select %p2010, %s16, 1
        %s2012 = smul.addr %s2011, 16
        %s2013 = smul.addr %s2012, 8
        %s2014 = scalar_lea.vmem %s4, %s2013
      $region48: #{attention_block.1} parent=43 // pred_fallthru
        _
    $region44: #{attention_block.1} parent=5 // pred_fallthru
      _
  $region6: #{attention_block.1} parent=0 // loop_footer
    %s14 = sadd.s32 1, %s10
  $region7: #{attention_block.1} parent=0 // loop_footer_branch
    %9 = sbr.rel target = $region3
  $region8: #{attention_block.1} parent=0 // loop_exit
    _

</llo_original>
